<compile_context>
chip_gen: v7x
topology: tpu7x:2x2x1
jax: 0.10.0
libtpu: 0.0.40
codegen_flags: <defaults>
</compile_context>

<pallas_src>
import numpy as np
import jax
import jax.numpy as jnp
from jax.experimental import pallas as pl
from jax.experimental.pallas import tpu as pltpu

LANE = 128
# Conservative activation-working-set budget: v7x has only 64 MiB VMEM per TensorCore
# (v5e/v6e have 128 MiB), so size tiles against ~40 MiB and leave headroom.
VMEM_BUDGET = 40 * 2**20


def _round_up(v, m):
    return (v + m - 1) // m * m


def _vmem_estimate(tile_h, w_p, cin_p, cout_p):
    """Rough per-step VMEM need: double-buffered blocks + resident weights + temps."""
    n_tot = (tile_h + 2) * w_p
    n = tile_h * w_p
    in_blk = n_tot * cin_p * 2                      # bf16 input window
    out_blk = n * cout_p * 2                        # bf16 output tile
    w_bytes = 9 * cin_p * cout_p * 2 + 2 * cout_p * 4
    temps = (4 * n_tot * cin_p * 4                  # flat32 / left32 / right32 / col
             + 2 * n_tot * cin_p * 2                # bf16 shifted copies
             + 2 * n * cout_p * 4)                  # acc + epilogue
    return 2 * (in_blk + out_blk + w_bytes) + temps


def conv_bn_relu_kernel(x_ref, w_ref, s_ref, t_ref, o_ref):
    """One (batch, row-tile) grid step: 3x3 conv (9 dots, f32 accum) + BN + ReLU.

    x_ref: (tile_h+2, W_p, Cin_p) bf16  overlapping row window (1-row halo each side)
    w_ref: (3, 3, Cin_p, Cout_p)  bf16  HWIO weights (channel padded)
    s_ref: (1, Cout_p)            f32   folded BN scale
    t_ref: (1, Cout_p)            f32   folded BN shift (includes conv bias)
    o_ref: (tile_h, W_p, Cout_p)  bf16
    """
    th2, width, cin_p = x_ref.shape
    tile_h, _, cout_p = o_ref.shape
    n = tile_h * width
    n_tot = th2 * width

    # Flattened halo'd tile; reshape only merges leading dims (lane dim untouched).
    flat = x_ref[...].reshape(n_tot, cin_p)                       # bf16
    flat32 = flat.astype(jnp.float32)                             # 32-bit for sublane roll

    # Column-edge masks over the FULL halo'd buffer (conv padding=1 => zero outside).
    col = jax.lax.broadcasted_iota(jnp.int32, (n_tot, cin_p), 0) % width
    # kj = 0 tap needs column w-1: roll +1 along the flattened row axis, zero at w == 0.
    left = jnp.where(col == 0, 0.0,
                     pltpu.roll(flat32, 1, 0)).astype(jnp.bfloat16)
    # kj = 2 tap needs column w+1: roll -1 (== n_tot-1), zero at w == width-1.
    right = jnp.where(col == width - 1, 0.0,
                      pltpu.roll(flat32, n_tot - 1, 0)).astype(jnp.bfloat16)

    # 9 taps = 9 aligned n-row slices of {left, flat, right} fed straight to the MXU;
    # no (n, 9*Cin_p) im2col patch is ever materialized.
    acc = jnp.zeros((n, cout_p), jnp.float32)
    for ki in range(3):                                           # kernel row tap
        base = ki * width
        acc += jnp.dot(left[base:base + n], w_ref[ki, 0],
                       preferred_element_type=jnp.float32)
        acc += jnp.dot(flat[base:base + n], w_ref[ki, 1],
                       preferred_element_type=jnp.float32)
        acc += jnp.dot(right[base:base + n], w_ref[ki, 2],
                       preferred_element_type=jnp.float32)

    # Folded BatchNorm (inference) + ReLU epilogue in f32; bf16 writeback.
    y = jnp.maximum(acc * s_ref[...] + t_ref[...], 0.0)
    o_ref[...] = y.astype(o_ref.dtype).reshape(tile_h, width, cout_p)


def single_conv_forward(x_nchw, params, tile_h=32):
    """x_nchw: [B, Cin, H, W] -> [B, Cout, H, W] (PyTorch NCHW semantics)."""
    w_hwio, scale, shift = params
    B, Cin, H, W = x_nchw.shape
    Cout = w_hwio.shape[-1]
    Cin_p = _round_up(Cin, LANE)
    Cout_p = _round_up(Cout, LANE)
    W_p = _round_up(W, 8)                      # sublane-aligned width (extra cols are zero)

    # Row-tile size: start from the request, shrink until blocks + temps fit the budget.
    tile_h = max(8, min(int(tile_h), _round_up(H, 8)))
    while tile_h > 8 and _vmem_estimate(tile_h, W_p, Cin_p, Cout_p) > VMEM_BUDGET:
        tile_h = max(8, tile_h // 2)
    n_h = pl.cdiv(H, tile_h)
    H_pad = n_h * tile_h

    # NHWC, channel-padded so the lane dim is dense; bf16 activations feed the MXU.
    # TODO(synk): in a full UNet keep activations NHWC/bf16/channel-padded end-to-end;
    # these transpose/pad ops are only needed at the PyTorch model boundary.
    # TODO(synk): small-Cin layers (stem) still pad the reduction dim per tap to 128;
    # packing 9*Cin into one padded K would cut HBM/MXU work several-x there.
    x = jnp.transpose(x_nchw, (0, 2, 3, 1)).astype(jnp.bfloat16)
    x = jnp.pad(x, ((0, 0), (0, 0), (0, W_p - W), (0, Cin_p - Cin)))

    # Overlapping (tile_h+2)-row windows (zeros at image borders / H remainder) so each
    # grid step sees its full conv footprint in ONE input block: no separate halo
    # stream and no in-kernel concatenate.
    # TODO(synk): an element-offset H BlockSpec could express this overlap without the
    # wrapper-side window gather.
    xz = jnp.pad(x, ((0, 0), (1, 1 + H_pad - H), (0, 0), (0, 0)))
    rows = jnp.arange(n_h)[:, None] * tile_h + jnp.arange(tile_h + 2)[None, :]
    xw = xz[:, rows]                                   # (B, n_h, tile_h+2, W_p, Cin_p)

    # Weights HWIO, channel padded, bf16; folded BN params padded, f32.
    w_p = jnp.pad(w_hwio, ((0, 0), (0, 0), (0, Cin_p - Cin),
                           (0, Cout_p - Cout))).astype(jnp.bfloat16)
    s_p = jnp.pad(scale, (0, Cout_p - Cout)).reshape(1, Cout_p)
    t_p = jnp.pad(shift, (0, Cout_p - Cout)).reshape(1, Cout_p)

    flops = 2 * B * H_pad * W_p * 9 * Cin_p * Cout_p
    bytes_accessed = (xw.size * 2 + w_p.size * 2 + (s_p.size + t_p.size) * 4
                      + B * H_pad * W_p * Cout_p * 2)

    out = pl.pallas_call(
        conv_bn_relu_kernel,
        out_shape=jax.ShapeDtypeStruct((B, H_pad, W_p, Cout_p), jnp.bfloat16),
        grid=(B, n_h),
        in_specs=[
            pl.BlockSpec((None, None, tile_h + 2, W_p, Cin_p),
                         lambda b, h: (b, h, 0, 0, 0)),
            # Weights / BN params: constant index maps -> DMA'd once, resident.
            # TODO(synk): pipeline_mode=pl.Buffered(1) here (and a Cout grid axis for
            # very wide layers) would drop their double buffer on VMEM-tight v7x.
            pl.BlockSpec((3, 3, Cin_p, Cout_p), lambda b, h: (0, 0, 0, 0)),
            pl.BlockSpec((1, Cout_p), lambda b, h: (0, 0)),
            pl.BlockSpec((1, Cout_p), lambda b, h: (0, 0)),
        ],
        out_specs=pl.BlockSpec((None, tile_h, W_p, Cout_p), lambda b, h: (b, h, 0, 0)),
        compiler_params=pltpu.CompilerParams(
            dimension_semantics=("parallel", "parallel"),
            vmem_limit_bytes=int(min(
                48 * 2**20,
                max(32 * 2**20, 2 * _vmem_estimate(tile_h, W_p, Cin_p, Cout_p)))),
        ),
        cost_estimate=pl.CostEstimate(flops=flops, transcendentals=0,
                                      bytes_accessed=bytes_accessed),
    )(xw, w_p, s_p, t_p)

    out = out[:, :H, :W, :Cout]
    # PyTorch boundary: back to NCHW f32 (kernel HBM writeback itself stays bf16).
    return jnp.transpose(out, (0, 3, 1, 2)).astype(jnp.float32)


def init_params(key, in_ch, out_ch, eps=1e-5):
    """Deterministic synthetic Conv+BN params; BN (inference) folded to scale/shift."""
    ks = jax.random.split(key, 6)
    fan_in = in_ch * 9
    w = jax.random.normal(ks[0], (3, 3, in_ch, out_ch), jnp.float32) / np.sqrt(fan_in)
    b = 0.1 * jax.random.normal(ks[1], (out_ch,), jnp.float32)
    gamma = 1.0 + 0.1 * jax.random.normal(ks[2], (out_ch,), jnp.float32)
    beta = 0.1 * jax.random.normal(ks[3], (out_ch,), jnp.float32)
    mean = 0.05 * jax.random.normal(ks[4], (out_ch,), jnp.float32)
    var = 1.0 + 0.1 * jnp.abs(jax.random.normal(ks[5], (out_ch,), jnp.float32))
    scale = gamma / jnp.sqrt(var + eps)
    shift = (b - mean) * scale + beta
    return (w, scale, shift)


def reference_forward(x_nchw, params):
    """Pure-JAX reference mirroring PyTorch semantics (NCHW in/out), with the same
    bf16 rounding of activations/weights/output the kernel applies."""
    w, scale, shift = params
    xq = x_nchw.astype(jnp.bfloat16).astype(jnp.float32)
    wq = w.astype(jnp.bfloat16).astype(jnp.float32)
    xh = jnp.transpose(xq, (0, 2, 3, 1))
    y = jax.lax.conv_general_dilated(xh, wq, (1, 1), "SAME",
                                     dimension_numbers=("NHWC", "HWIO", "NHWC"))
    y = jnp.maximum(y * scale + shift, 0.0)
    y = y.astype(jnp.bfloat16).astype(jnp.float32)      # match kernel bf16 writeback
    return jnp.transpose(y, (0, 3, 1, 2))


if __name__ == "__main__":
    B, Cin, Cout, H, W = 2, 4, 8, 16, 16
    key = jax.random.PRNGKey(0)
    kx, kp = jax.random.split(key)

    x = jax.random.normal(kx, (B, Cin, H, W), jnp.float32)
    params = init_params(kp, Cin, Cout)

    # tile_h=8 -> grid (B, H // 8) = (2, 2): exercises row-tile seams / halo handling.
    out = single_conv_forward(x, params, tile_h=8)
    out = jax.block_until_ready(out)

    ref = reference_forward(x, params)
    assert out.shape == (B, Cout, H, W), out.shape
    np.testing.assert_allclose(np.asarray(out), np.asarray(ref), rtol=2e-2, atol=2e-2)
    # TODO(synk): BatchNorm uses inference-mode (running-stat) semantics; training-mode
    # batch statistics are not implemented.
    print("KERNEL_OK")
</pallas_src>

<mosaic_0001>
module attributes {stable_mosaic.version = 11 : i64} {
  func.func @conv_bn_relu_kernel(%arg0: i32, %arg1: i32, %arg2: memref<1x1x10x16x128xbf16, #tpu.memory_space<vmem>>, %arg3: memref<3x3x128x128xbf16, #tpu.memory_space<vmem>>, %arg4: memref<1x128xf32, #tpu.memory_space<vmem>>, %arg5: memref<1x128xf32, #tpu.memory_space<vmem>>, %arg6: memref<1x8x16x128xbf16, #tpu.memory_space<vmem>>) attributes {dimension_semantics = [#tpu.dimension_semantics<parallel>, #tpu.dimension_semantics<parallel>], iteration_bounds = array<i64: 2, 2>, scalar_prefetch = 0 : i64, scratch_operands = 0 : i64, tpu.core_type = #tpu.core_type<tc>, window_params = [{transform_indices = @transform_0, window_bounds = array<i64: 1, 1, 10, 16, 128>}, {pipeline_mode = #tpu.pipeline_mode<synchronous>, transform_indices = @transform_1, window_bounds = array<i64: 3, 3, 128, 128>}, {pipeline_mode = #tpu.pipeline_mode<synchronous>, transform_indices = @transform_2, window_bounds = array<i64: 1, 128>}, {pipeline_mode = #tpu.pipeline_mode<synchronous>, transform_indices = @transform_3, window_bounds = array<i64: 1, 128>}, {transform_indices = @transform_4, window_bounds = array<i64: 1, 8, 16, 128>}]} {
    %c0 = arith.constant 0 : index
    %c0_0 = arith.constant 0 : index
    %c0_1 = arith.constant 0 : index
    %c0_2 = arith.constant 0 : index
    %c0_3 = arith.constant 0 : index
    %0 = vector.load %arg2[%c0, %c0_0, %c0_1, %c0_2, %c0_3] : memref<1x1x10x16x128xbf16, #tpu.memory_space<vmem>>, vector<1x1x10x16x128xbf16>
    %1 = vector.shape_cast %0 : vector<1x1x10x16x128xbf16> to vector<10x16x128xbf16>
    %2 = vector.shape_cast %1 : vector<10x16x128xbf16> to vector<160x128xbf16>
    %3 = arith.extf %2 : vector<160x128xbf16> to vector<160x128xf32>
    %4 = tpu.iota {dimensions = array<i32: 0>} : vector<160x128xi32>
    %c16_i32 = arith.constant 16 : i32
    %c0_i32 = arith.constant 0 : i32
    %5 = arith.cmpi eq, %c16_i32, %c0_i32 : i32
    %c1_i32 = arith.constant 1 : i32
    %6 = arith.select %5, %c1_i32, %c16_i32 : i32
    %7 = vector.broadcast %6 : i32 to vector<160x128xi32>
    %8 = arith.remsi %4, %7 : vector<160x128xi32>
    %c0_i32_4 = arith.constant 0 : i32
    %9 = vector.broadcast %c0_i32_4 : i32 to vector<160x128xi32>
    %10 = arith.cmpi ne, %8, %9 : vector<160x128xi32>
    %c0_i32_5 = arith.constant 0 : i32
    %11 = vector.broadcast %c0_i32_5 : i32 to vector<160x128xi32>
    %12 = arith.cmpi slt, %8, %11 : vector<160x128xi32>
    %c0_i32_6 = arith.constant 0 : i32
    %13 = arith.cmpi slt, %6, %c0_i32_6 : i32
    %14 = vector.broadcast %13 : i1 to vector<160x128xi1>
    %15 = vector.broadcast %14 : vector<160x128xi1> to vector<160x128xi1>
    %16 = arith.xori %12, %15 : vector<160x128xi1>
    %17 = arith.andi %16, %10 : vector<160x128xi1>
    %18 = vector.broadcast %6 : i32 to vector<160x128xi32>
    %19 = arith.addi %8, %18 : vector<160x128xi32>
    %20 = arith.select %17, %19, %8 : vector<160x128xi1>, vector<160x128xi32>
    %c0_i32_7 = arith.constant 0 : i32
    %21 = vector.broadcast %c0_i32_7 : i32 to vector<160x128xi32>
    %22 = arith.cmpi eq, %20, %21 : vector<160x128xi32>
    %c1_i32_8 = arith.constant 1 : i32
    %23 = tpu.dynamic_rotate %3 by %c1_i32_8 dim 0 : vector<160x128xf32>, i32 -> vector<160x128xf32>
    %cst = arith.constant 0.000000e+00 : f32
    %24 = vector.broadcast %cst : f32 to vector<160x128xf32>
    %25 = arith.select %22, %24, %23 : vector<160x128xi1>, vector<160x128xf32>
    %26 = arith.truncf %25 : vector<160x128xf32> to vector<160x128xbf16>
    %c15_i32 = arith.constant 15 : i32
    %27 = vector.broadcast %c15_i32 : i32 to vector<160x128xi32>
    %28 = arith.cmpi eq, %20, %27 : vector<160x128xi32>
    %c159_i32 = arith.constant 159 : i32
    %29 = tpu.dynamic_rotate %3 by %c159_i32 dim 0 : vector<160x128xf32>, i32 -> vector<160x128xf32>
    %cst_9 = arith.constant 0.000000e+00 : f32
    %30 = vector.broadcast %cst_9 : f32 to vector<160x128xf32>
    %31 = arith.select %28, %30, %29 : vector<160x128xi1>, vector<160x128xf32>
    %32 = arith.truncf %31 : vector<160x128xf32> to vector<160x128xbf16>
    %cst_10 = arith.constant 0.000000e+00 : f32
    %33 = vector.broadcast %cst_10 : f32 to vector<128x128xf32>
    %34 = vector.extract_strided_slice %26 {offsets = [0, 0], sizes = [128, 128], strides = [1, 1]} : vector<160x128xbf16> to vector<128x128xbf16>
    %c0_11 = arith.constant 0 : index
    %c0_12 = arith.constant 0 : index
    %c0_13 = arith.constant 0 : index
    %c0_14 = arith.constant 0 : index
    %35 = vector.load %arg3[%c0_11, %c0_12, %c0_13, %c0_14] : memref<3x3x128x128xbf16, #tpu.memory_space<vmem>>, vector<1x1x128x128xbf16>
    %36 = vector.shape_cast %35 : vector<1x1x128x128xbf16> to vector<128x128xbf16>
    %cst_15 = arith.constant dense<0.000000e+00> : vector<128x128xf32>
    %37 = tpu.matmul %34, %36, %cst_15 {dimension_numbers = #tpu.dot_dimension_numbers<[1], [0], [0], [1], [0, 0, 1, 1], [], []>} : vector<128x128xbf16>, vector<128x128xbf16>, vector<128x128xf32> -> vector<128x128xf32>
    %38 = arith.addf %33, %37 : vector<128x128xf32>
    %39 = vector.extract_strided_slice %2 {offsets = [0, 0], sizes = [128, 128], strides = [1, 1]} : vector<160x128xbf16> to vector<128x128xbf16>
    %c0_16 = arith.constant 0 : index
    %c1 = arith.constant 1 : index
    %c0_17 = arith.constant 0 : index
    %c0_18 = arith.constant 0 : index
    %40 = vector.load %arg3[%c0_16, %c1, %c0_17, %c0_18] : memref<3x3x128x128xbf16, #tpu.memory_space<vmem>>, vector<1x1x128x128xbf16>
    %41 = vector.shape_cast %40 : vector<1x1x128x128xbf16> to vector<128x128xbf16>
    %cst_19 = arith.constant dense<0.000000e+00> : vector<128x128xf32>
    %42 = tpu.matmul %39, %41, %cst_19 {dimension_numbers = #tpu.dot_dimension_numbers<[1], [0], [0], [1], [0, 0, 1, 1], [], []>} : vector<128x128xbf16>, vector<128x128xbf16>, vector<128x128xf32> -> vector<128x128xf32>
    %43 = arith.addf %38, %42 : vector<128x128xf32>
    %44 = vector.extract_strided_slice %32 {offsets = [0, 0], sizes = [128, 128], strides = [1, 1]} : vector<160x128xbf16> to vector<128x128xbf16>
    %c0_20 = arith.constant 0 : index
    %c2 = arith.constant 2 : index
    %c0_21 = arith.constant 0 : index
    %c0_22 = arith.constant 0 : index
    %45 = vector.load %arg3[%c0_20, %c2, %c0_21, %c0_22] : memref<3x3x128x128xbf16, #tpu.memory_space<vmem>>, vector<1x1x128x128xbf16>
    %46 = vector.shape_cast %45 : vector<1x1x128x128xbf16> to vector<128x128xbf16>
    %cst_23 = arith.constant dense<0.000000e+00> : vector<128x128xf32>
    %47 = tpu.matmul %44, %46, %cst_23 {dimension_numbers = #tpu.dot_dimension_numbers<[1], [0], [0], [1], [0, 0, 1, 1], [], []>} : vector<128x128xbf16>, vector<128x128xbf16>, vector<128x128xf32> -> vector<128x128xf32>
    %48 = arith.addf %43, %47 : vector<128x128xf32>
    %49 = vector.extract_strided_slice %26 {offsets = [16, 0], sizes = [128, 128], strides = [1, 1]} : vector<160x128xbf16> to vector<128x128xbf16>
    %c1_24 = arith.constant 1 : index
    %c0_25 = arith.constant 0 : index
    %c0_26 = arith.constant 0 : index
    %c0_27 = arith.constant 0 : index
    %50 = vector.load %arg3[%c1_24, %c0_25, %c0_26, %c0_27] : memref<3x3x128x128xbf16, #tpu.memory_space<vmem>>, vector<1x1x128x128xbf16>
    %51 = vector.shape_cast %50 : vector<1x1x128x128xbf16> to vector<128x128xbf16>
    %cst_28 = arith.constant dense<0.000000e+00> : vector<128x128xf32>
    %52 = tpu.matmul %49, %51, %cst_28 {dimension_numbers = #tpu.dot_dimension_numbers<[1], [0], [0], [1], [0, 0, 1, 1], [], []>} : vector<128x128xbf16>, vector<128x128xbf16>, vector<128x128xf32> -> vector<128x128xf32>
    %53 = arith.addf %48, %52 : vector<128x128xf32>
    %54 = vector.extract_strided_slice %2 {offsets = [16, 0], sizes = [128, 128], strides = [1, 1]} : vector<160x128xbf16> to vector<128x128xbf16>
    %c1_29 = arith.constant 1 : index
    %c1_30 = arith.constant 1 : index
    %c0_31 = arith.constant 0 : index
    %c0_32 = arith.constant 0 : index
    %55 = vector.load %arg3[%c1_29, %c1_30, %c0_31, %c0_32] : memref<3x3x128x128xbf16, #tpu.memory_space<vmem>>, vector<1x1x128x128xbf16>
    %56 = vector.shape_cast %55 : vector<1x1x128x128xbf16> to vector<128x128xbf16>
    %cst_33 = arith.constant dense<0.000000e+00> : vector<128x128xf32>
    %57 = tpu.matmul %54, %56, %cst_33 {dimension_numbers = #tpu.dot_dimension_numbers<[1], [0], [0], [1], [0, 0, 1, 1], [], []>} : vector<128x128xbf16>, vector<128x128xbf16>, vector<128x128xf32> -> vector<128x128xf32>
    %58 = arith.addf %53, %57 : vector<128x128xf32>
    %59 = vector.extract_strided_slice %32 {offsets = [16, 0], sizes = [128, 128], strides = [1, 1]} : vector<160x128xbf16> to vector<128x128xbf16>
    %c1_34 = arith.constant 1 : index
    %c2_35 = arith.constant 2 : index
    %c0_36 = arith.constant 0 : index
    %c0_37 = arith.constant 0 : index
    %60 = vector.load %arg3[%c1_34, %c2_35, %c0_36, %c0_37] : memref<3x3x128x128xbf16, #tpu.memory_space<vmem>>, vector<1x1x128x128xbf16>
    %61 = vector.shape_cast %60 : vector<1x1x128x128xbf16> to vector<128x128xbf16>
    %cst_38 = arith.constant dense<0.000000e+00> : vector<128x128xf32>
    %62 = tpu.matmul %59, %61, %cst_38 {dimension_numbers = #tpu.dot_dimension_numbers<[1], [0], [0], [1], [0, 0, 1, 1], [], []>} : vector<128x128xbf16>, vector<128x128xbf16>, vector<128x128xf32> -> vector<128x128xf32>
    %63 = arith.addf %58, %62 : vector<128x128xf32>
    %64 = vector.extract_strided_slice %26 {offsets = [32, 0], sizes = [128, 128], strides = [1, 1]} : vector<160x128xbf16> to vector<128x128xbf16>
    %c2_39 = arith.constant 2 : index
    %c0_40 = arith.constant 0 : index
    %c0_41 = arith.constant 0 : index
    %c0_42 = arith.constant 0 : index
    %65 = vector.load %arg3[%c2_39, %c0_40, %c0_41, %c0_42] : memref<3x3x128x128xbf16, #tpu.memory_space<vmem>>, vector<1x1x128x128xbf16>
    %66 = vector.shape_cast %65 : vector<1x1x128x128xbf16> to vector<128x128xbf16>
    %cst_43 = arith.constant dense<0.000000e+00> : vector<128x128xf32>
    %67 = tpu.matmul %64, %66, %cst_43 {dimension_numbers = #tpu.dot_dimension_numbers<[1], [0], [0], [1], [0, 0, 1, 1], [], []>} : vector<128x128xbf16>, vector<128x128xbf16>, vector<128x128xf32> -> vector<128x128xf32>
    %68 = arith.addf %63, %67 : vector<128x128xf32>
    %69 = vector.extract_strided_slice %2 {offsets = [32, 0], sizes = [128, 128], strides = [1, 1]} : vector<160x128xbf16> to vector<128x128xbf16>
    %c2_44 = arith.constant 2 : index
    %c1_45 = arith.constant 1 : index
    %c0_46 = arith.constant 0 : index
    %c0_47 = arith.constant 0 : index
    %70 = vector.load %arg3[%c2_44, %c1_45, %c0_46, %c0_47] : memref<3x3x128x128xbf16, #tpu.memory_space<vmem>>, vector<1x1x128x128xbf16>
    %71 = vector.shape_cast %70 : vector<1x1x128x128xbf16> to vector<128x128xbf16>
    %cst_48 = arith.constant dense<0.000000e+00> : vector<128x128xf32>
    %72 = tpu.matmul %69, %71, %cst_48 {dimension_numbers = #tpu.dot_dimension_numbers<[1], [0], [0], [1], [0, 0, 1, 1], [], []>} : vector<128x128xbf16>, vector<128x128xbf16>, vector<128x128xf32> -> vector<128x128xf32>
    %73 = arith.addf %68, %72 : vector<128x128xf32>
    %74 = vector.extract_strided_slice %32 {offsets = [32, 0], sizes = [128, 128], strides = [1, 1]} : vector<160x128xbf16> to vector<128x128xbf16>
    %c2_49 = arith.constant 2 : index
    %c2_50 = arith.constant 2 : index
    %c0_51 = arith.constant 0 : index
    %c0_52 = arith.constant 0 : index
    %75 = vector.load %arg3[%c2_49, %c2_50, %c0_51, %c0_52] : memref<3x3x128x128xbf16, #tpu.memory_space<vmem>>, vector<1x1x128x128xbf16>
    %76 = vector.shape_cast %75 : vector<1x1x128x128xbf16> to vector<128x128xbf16>
    %cst_53 = arith.constant dense<0.000000e+00> : vector<128x128xf32>
    %77 = tpu.matmul %74, %76, %cst_53 {dimension_numbers = #tpu.dot_dimension_numbers<[1], [0], [0], [1], [0, 0, 1, 1], [], []>} : vector<128x128xbf16>, vector<128x128xbf16>, vector<128x128xf32> -> vector<128x128xf32>
    %78 = arith.addf %73, %77 : vector<128x128xf32>
    %c0_54 = arith.constant 0 : index
    %c0_55 = arith.constant 0 : index
    %79 = vector.load %arg4[%c0_54, %c0_55] : memref<1x128xf32, #tpu.memory_space<vmem>>, vector<1x128xf32>
    %80 = vector.broadcast %79 : vector<1x128xf32> to vector<128x128xf32>
    %81 = arith.mulf %78, %80 : vector<128x128xf32>
    %c0_56 = arith.constant 0 : index
    %c0_57 = arith.constant 0 : index
    %82 = vector.load %arg5[%c0_56, %c0_57] : memref<1x128xf32, #tpu.memory_space<vmem>>, vector<1x128xf32>
    %83 = vector.broadcast %82 : vector<1x128xf32> to vector<128x128xf32>
    %84 = arith.addf %81, %83 : vector<128x128xf32>
    %cst_58 = arith.constant 0.000000e+00 : f32
    %85 = vector.broadcast %cst_58 : f32 to vector<128x128xf32>
    %86 = arith.maximumf %84, %85 : vector<128x128xf32>
    %87 = arith.truncf %86 : vector<128x128xf32> to vector<128x128xbf16>
    %88 = vector.shape_cast %87 : vector<128x128xbf16> to vector<8x16x128xbf16>
    %c0_59 = arith.constant 0 : index
    %c0_60 = arith.constant 0 : index
    %c0_61 = arith.constant 0 : index
    %c0_62 = arith.constant 0 : index
    %89 = vector.load %arg6[%c0_59, %c0_60, %c0_61, %c0_62] : memref<1x8x16x128xbf16, #tpu.memory_space<vmem>>, vector<1x8x16x128xbf16>
    %90 = vector.shape_cast %89 : vector<1x8x16x128xbf16> to vector<8x16x128xbf16>
    %91 = vector.shape_cast %88 : vector<8x16x128xbf16> to vector<1x8x16x128xbf16>
    tpu.vector_store %arg6[%c0_59, %c0_60, %c0_61, %c0_62], %91 {strides = array<i32>} : memref<1x8x16x128xbf16, #tpu.memory_space<vmem>>, vector<1x8x16x128xbf16>,
    return
  }
  func.func @transform_0(%arg0: i32, %arg1: i32) -> (i32, i32, i32, i32, i32) {
    %c0_i32 = arith.constant 0 : i32
    %c0_i32_0 = arith.constant 0 : i32
    %c0_i32_1 = arith.constant 0 : i32
    %c0_i32_2 = arith.constant 0 : i32
    return %arg0, %arg1, %c0_i32, %c0_i32_0, %c0_i32_1 : i32, i32, i32, i32, i32
  }
  func.func @transform_1(%arg0: i32, %arg1: i32) -> (i32, i32, i32, i32) {
    %c0_i32 = arith.constant 0 : i32
    %c0_i32_0 = arith.constant 0 : i32
    %c0_i32_1 = arith.constant 0 : i32
    %c0_i32_2 = arith.constant 0 : i32
    %c0_i32_3 = arith.constant 0 : i32
    return %c0_i32, %c0_i32_0, %c0_i32_1, %c0_i32_2 : i32, i32, i32, i32
  }
  func.func @transform_2(%arg0: i32, %arg1: i32) -> (i32, i32) {
    %c0_i32 = arith.constant 0 : i32
    %c0_i32_0 = arith.constant 0 : i32
    %c0_i32_1 = arith.constant 0 : i32
    return %c0_i32, %c0_i32_0 : i32, i32
  }
  func.func @transform_3(%arg0: i32, %arg1: i32) -> (i32, i32) {
    %c0_i32 = arith.constant 0 : i32
    %c0_i32_0 = arith.constant 0 : i32
    %c0_i32_1 = arith.constant 0 : i32
    return %c0_i32, %c0_i32_0 : i32, i32
  }
  func.func @transform_4(%arg0: i32, %arg1: i32) -> (i32, i32, i32, i32) {
    %c0_i32 = arith.constant 0 : i32
    %c0_i32_0 = arith.constant 0 : i32
    %c0_i32_1 = arith.constant 0 : i32
    return %arg0, %arg1, %c0_i32, %c0_i32_0 : i32, i32, i32, i32
  }
}

</mosaic_0001>

<llo_original>
// kernel: tpu_custom_call.1
$region0: #{tpu_custom_call.1}
  #allocation0 [shape = 'u32[]', space=smem, size = 0x4, offset = 0x4, fixed_abs, tag = 'smem constant byte address 0x4 - core index']
  #allocation1 [shape = 'u32[144,128]{1,0:T(1,128)}', space=vmem, size = 0x12000, scoped, tag = 'internal scratch']
  %s0 = inlined_call_operand.hbm [shape: bf16[2,2,10,16,128], index: 0, kind: input, shape index: {}]
  %s1 = inlined_call_operand.hbm [shape: bf16[3,3,128,128], index: 1, kind: input, shape index: {}]
  %s2 = inlined_call_operand.vmem [shape: f32[1,128], index: 2, kind: input, shape index: {}]
  %s3 = inlined_call_operand.vmem [shape: f32[1,128], index: 3, kind: input, shape index: {}]
  %s4 = inlined_call_operand.hbm [shape: bf16[2,16,16,128], index: 4, kind: output, shape index: {}]
  %s5 = sld [smem:[#allocation0]]
  $region57: #{tpu_custom_call.1} parent=0
    _
  %s7 = ssub.s32 1, %s5
  %s8 = scalar_select 0, %s7, %s5
  $region1: #{tpu_custom_call.1} parent=0
    #allocation2 [shape = 'u8[81920]{0}', space=vmem, size = 0x14000, scoped, tag = 'input window, operand 0']
    #allocation3 [shape = 's32[2]{0}', space=sflag, size = 0x8, scoped, tag = 'scoped memory for tpu_custom_call.1']
    #allocation4 [shape = 's32[2]{0}', space=sflag, size = 0x8, scoped, tag = 'scoped memory for tpu_custom_call.1']
    #allocation5 [shape = 'u8[294912]{0}', space=vmem, size = 0x48000, scoped, tag = 'input window, operand 1, single buffered']
    #allocation6 [shape = 's32[1]{0}', space=sflag, size = 0x4, scoped, tag = 'scoped memory for tpu_custom_call.1']
    #allocation7 [shape = 'u8[65536]{0}', space=vmem, size = 0x10000, scoped, tag = 'output window, operand 0']
    %9 = vsyncpa [#allocation3], 0
    %s10 = scalar_lea.sflag [#allocation3], 1
    %11 = vsyncpa %s10, 0
    %12 = vsyncpa [#allocation6], 0
    %13 = vsyncpa [#allocation4], 0
    %s14 = scalar_lea.sflag [#allocation4], 1
    %15 = vsyncpa %s14, 0
    loop: start=0, step=1, limit=6
    $region2: #{tpu_custom_call.1} parent=1 // loop_pre_header
      _
    $region3: #{tpu_custom_call.1} parent=1 // loop_header
      %s17 = sphi 0, %s21
      %p18 = scmp.ge.s32.totalorder %s17, 6
      %s24 = sphi 0, %s36
      %s25 = sphi 0, %s32
      %s26 = sphi 0, %s24
      %s27 = sphi 0, %s25
      %s28 = sphi 0, %s26
      %s29 = sphi 0, %s27
      %s41 = sphi 0, %s43
      %s44 = sphi 0, %s41
      %s45 = sphi 0, %s44
      %s61 = sphi 0, %s45
      %s65 = sphi 0, %s65
      %s67 = sphi 0, %s65
      %s68 = sphi 0, %s67
      %s82 = sphi 0, %s68
      %s86 = sphi 0, %s86
      %s88 = sphi 0, %s86
      %s89 = sphi 0, %s88
      %s103 = sphi 0, %s89
      %s107 = sphi 0, %s107
      %s109 = sphi 0, %s107
      %s110 = sphi 0, %s109
      %s124 = sphi 0, %s110
      %s132 = sphi 0, %s134
      %s135 = sphi 0, %s132
      %s136 = sphi 0, %s135
      %s152 = sphi 0, %s136
    $region4: #{tpu_custom_call.1} parent=1 // loop_header_branch
      %20 = sbr.rel (%p18) target = $region8
    $region5: #{tpu_custom_call.1} parent=1 // loop_body
      %s22 = ssub.s32 %s17, 1
      %s23 = ssub.s32 %s17, 2
      %s30 = sadd.s32 1, %s25
      %p31 = scmp.ge.s32.totalorder %s30, 2
      %s32 = scalar_select %p31, 0, %s30
      %s33 = sadd.s32 1, %s24
      %s34 = scalar_select %p31, %s33, %s24
      %p35 = scmp.ge.s32.totalorder %s34, 2
      %s36 = scalar_select %p35, 0, %s34
      %s37 = ssub.s32 %s24, %s36
      %s38 = ssub.s32 %s25, %s32
      %s39 = sor.u32 %s37, %s38
      %p40 = scmp.eq.s32.totalorder %s39, 0
      %s42 = sadd.s32 %s41, 1
      %s43 = scalar_select %p40, %s41, %s42
      %p46 = pneg %p40
      %p47 = scmp.eq.s32.totalorder %s17, 3
      %p48 = por %p46, %p47
      %p49 = scmp.ne.s32.totalorder %s41, %s44
      %p50 = scmp.eq.s32.totalorder %s17, 0
      %p51 = por %p49, %p50
      %p52 = scmp.ne.s32.totalorder %s41, %s44
      %p53 = scmp.eq.s32.totalorder %s22, 3
      %p54 = por %p52, %p53
      %p55 = scmp.ne.s32.totalorder %s44, %s45
      %p56 = scmp.eq.s32.totalorder %s22, 0
      %p57 = por %p55, %p56
      %p58 = scmp.ne.s32.totalorder %s44, %s45
      %p59 = scmp.eq.s32.totalorder %s23, 3
      %p60 = por %p58, %p59
      %p62 = scmp.ne.s32.totalorder %s45, %s61
      %p63 = scmp.eq.s32.totalorder %s23, 0
      %p64 = por %p62, %p63
      %s66 = sadd.s32 %s65, 1
      %p69 = scmp.eq.s32.totalorder %s17, 3
      %p70 = scmp.ne.s32.totalorder %s65, %s67
      %p71 = scmp.eq.s32.totalorder %s17, 0
      %p72 = por %p70, %p71
      %p73 = scmp.ne.s32.totalorder %s65, %s67
      %p74 = scmp.eq.s32.totalorder %s22, 3
      %p75 = por %p73, %p74
      %p76 = scmp.ne.s32.totalorder %s67, %s68
      %p77 = scmp.eq.s32.totalorder %s22, 0
      %p78 = por %p76, %p77
      %p79 = scmp.ne.s32.totalorder %s67, %s68
      %p80 = scmp.eq.s32.totalorder %s23, 3
      %p81 = por %p79, %p80
      %p83 = scmp.ne.s32.totalorder %s68, %s82
      %p84 = scmp.eq.s32.totalorder %s23, 0
      %p85 = por %p83, %p84
      %s87 = sadd.s32 %s86, 1
      %p90 = scmp.eq.s32.totalorder %s17, 3
      %p91 = scmp.ne.s32.totalorder %s86, %s88
      %p92 = scmp.eq.s32.totalorder %s17, 0
      %p93 = por %p91, %p92
      %p94 = scmp.ne.s32.totalorder %s86, %s88
      %p95 = scmp.eq.s32.totalorder %s22, 3
      %p96 = por %p94, %p95
      %p97 = scmp.ne.s32.totalorder %s88, %s89
      %p98 = scmp.eq.s32.totalorder %s22, 0
      %p99 = por %p97, %p98
      %p100 = scmp.ne.s32.totalorder %s88, %s89
      %p101 = scmp.eq.s32.totalorder %s23, 3
      %p102 = por %p100, %p101
      %p104 = scmp.ne.s32.totalorder %s89, %s103
      %p105 = scmp.eq.s32.totalorder %s23, 0
      %p106 = por %p104, %p105
      %s108 = sadd.s32 %s107, 1
      %p111 = scmp.eq.s32.totalorder %s17, 3
      %p112 = scmp.ne.s32.totalorder %s107, %s109
      %p113 = scmp.eq.s32.totalorder %s17, 0
      %p114 = por %p112, %p113
      %p115 = scmp.ne.s32.totalorder %s107, %s109
      %p116 = scmp.eq.s32.totalorder %s22, 3
      %p117 = por %p115, %p116
      %p118 = scmp.ne.s32.totalorder %s109, %s110
      %p119 = scmp.eq.s32.totalorder %s22, 0
      %p120 = por %p118, %p119
      %p121 = scmp.ne.s32.totalorder %s109, %s110
      %p122 = scmp.eq.s32.totalorder %s23, 3
      %p123 = por %p121, %p122
      %p125 = scmp.ne.s32.totalorder %s110, %s124
      %p126 = scmp.eq.s32.totalorder %s23, 0
      %p127 = por %p125, %p126
      %s128 = ssub.s32 %s24, %s36
      %s129 = ssub.s32 %s25, %s32
      %s130 = sor.u32 %s128, %s129
      %p131 = scmp.eq.s32.totalorder %s130, 0
      %s133 = sadd.s32 %s132, 1
      %s134 = scalar_select %p131, %s132, %s133
      %p137 = pneg %p131
      %p138 = scmp.eq.s32.totalorder %s17, 3
      %p139 = por %p137, %p138
      %p140 = scmp.ne.s32.totalorder %s132, %s135
      %p141 = scmp.eq.s32.totalorder %s17, 0
      %p142 = por %p140, %p141
      %p143 = scmp.ne.s32.totalorder %s132, %s135
      %p144 = scmp.eq.s32.totalorder %s22, 3
      %p145 = por %p143, %p144
      %p146 = scmp.ne.s32.totalorder %s135, %s136
      %p147 = scmp.eq.s32.totalorder %s22, 0
      %p148 = por %p146, %p147
      %p149 = scmp.ne.s32.totalorder %s135, %s136
      %p150 = scmp.eq.s32.totalorder %s23, 3
      %p151 = por %p149, %p150
      %p153 = scmp.ne.s32.totalorder %s136, %s152
      %p154 = scmp.eq.s32.totalorder %s23, 0
      %p155 = por %p153, %p154
      %p156 = scmp.le.s32.totalorder 1, %s17
      %p157 = scmp.lt.s32.totalorder %s17, 5
      %p158 = pnand %p156, %p157
      %p159 = pneg %p158
      // Predicated region
      $region9: #{tpu_custom_call.1} parent=5 // pred_check
        _
      $region10: #{tpu_custom_call.1} parent=5 // pred_check_branch
        %161 = sbr.rel (%p158) target = $region12
      $region11: #{tpu_custom_call.1} parent=5 // pred_region
        %s162 = ssub.s32 %s17, 1
        // Predicated region
        $region13: #{tpu_custom_call.1} parent=11 // pred_check
          %p163 = pneg %p78
        $region14: #{tpu_custom_call.1} parent=11 // pred_check_branch
          %165 = sbr.rel (%p163) target = $region16
        $region15: #{tpu_custom_call.1} parent=11 // pred_region
          %s167 = ssub.s32 9216, 9216
          %168 = vsyncadd [#allocation6], %s167
          %s169 = sshll.u32 [#allocation5], 4
          %s170 = int_to_ptr.vmem [resolvable:$true] %s169
          %175 = dma.hbm_to_vmem [thread:$0]  %s1, 9216, %s170, [#allocation6], 64, 64, 4
        $region16: #{tpu_custom_call.1} parent=11 // pred_fallthru
          _
        // Predicated region
        $region17: #{tpu_custom_call.1} parent=11 // pred_check
          %p176 = pneg %p99
        $region18: #{tpu_custom_call.1} parent=11 // pred_check_branch
          %178 = sbr.rel (%p176) target = $region20
        $region19: #{tpu_custom_call.1} parent=11 // pred_region
          _
        $region20: #{tpu_custom_call.1} parent=11 // pred_fallthru
          _
        // Predicated region
        $region21: #{tpu_custom_call.1} parent=11 // pred_check
          %p179 = pneg %p120
        $region22: #{tpu_custom_call.1} parent=11 // pred_check_branch
          %181 = sbr.rel (%p179) target = $region24
        $region23: #{tpu_custom_call.1} parent=11 // pred_region
          _
        $region24: #{tpu_custom_call.1} parent=11 // pred_fallthru
          _
      $region12: #{tpu_custom_call.1} parent=5 // pred_fallthru
        _
      %p182 = scmp.lt.s32.totalorder %s17, 4
      // Predicated region
      $region25: #{tpu_custom_call.1} parent=5 // pred_check
        %p183 = pneg %p182
      $region26: #{tpu_custom_call.1} parent=5 // pred_check_branch
        %185 = sbr.rel (%p183) target = $region28
      $region27: #{tpu_custom_call.1} parent=5 // pred_region
        // Predicated region
        $region29: #{tpu_custom_call.1} parent=27 // pred_check
          %p186 = pneg %p51
        $region30: #{tpu_custom_call.1} parent=27 // pred_check_branch
          %188 = sbr.rel (%p186) target = $region32
        $region31: #{tpu_custom_call.1} parent=27 // pred_region
          %s189 = sand.u32 %s41, 1
          %s190 = scalar_lea.sflag [#allocation3], %s189
          %s191 = sand.u32 %s41, 1
          %s192 = smul.addr %s191, 80
          %s193 = scalar_lea.vmem [#allocation2], %s192
          %s195 = ssub.s32 1280, 1280
          %196 = vsyncadd %s190, %s195
          %s197 = smul.addr %s25, 20
          %s198 = smul.addr %s24, 40
          %s199 = sadd.s32 %s197, %s198
          %s200 = smul.addr %s199, 64
          %s201 = scalar_lea.hbm %s0, %s200
          %s202 = sshll.u32 %s193, 4
          %s203 = int_to_ptr.vmem [resolvable:$true] %s202
          %208 = dma.hbm_to_vmem [thread:$0]  %s201, 1280, %s203, %s190, 64, 64, 4
        $region32: #{tpu_custom_call.1} parent=27 // pred_fallthru
          _
      $region28: #{tpu_custom_call.1} parent=5 // pred_fallthru
        _
      %p209 = scmp.le.s32.totalorder 1, %s17
      %p210 = scmp.lt.s32.totalorder %s17, 5
      %p211 = pnand %p209, %p210
      %p212 = pneg %p211
      // Predicated region
      $region33: #{tpu_custom_call.1} parent=5 // pred_check
        _
      $region34: #{tpu_custom_call.1} parent=5 // pred_check_branch
        %214 = sbr.rel (%p211) target = $region36
      $region35: #{tpu_custom_call.1} parent=5 // pred_region
        %s215 = ssub.s32 %s17, 1
        %s216 = sand.u32 %s44, 1
        %s217 = scalar_lea.sflag [#allocation3], %s216
        %s218 = sand.u32 %s44, 1
        %s219 = smul.addr %s218, 80
        %s220 = scalar_lea.vmem [#allocation2], %s219
        // Predicated region
        $region37: #{tpu_custom_call.1} parent=35 // pred_check
          %p221 = pneg %p57
        $region38: #{tpu_custom_call.1} parent=35 // pred_check_branch
          %223 = sbr.rel (%p221) target = $region40
        $region39: #{tpu_custom_call.1} parent=35 // pred_region
          %224 = dma.done %s217, 1280
        $region40: #{tpu_custom_call.1} parent=35 // pred_fallthru
          _
        // Predicated region
        $region41: #{tpu_custom_call.1} parent=35 // pred_check
          %p225 = pneg %p78
        $region42: #{tpu_custom_call.1} parent=35 // pred_check_branch
          %227 = sbr.rel (%p225) target = $region44
        $region43: #{tpu_custom_call.1} parent=35 // pred_region
          %228 = dma.done [#allocation6], 9216
        $region44: #{tpu_custom_call.1} parent=35 // pred_fallthru
          _
        %s229 = sand.u32 %s44, 1
        %s230 = scalar_lea.sflag [#allocation3], %s229
        %s231 = sand.u32 %s44, 1
        %s232 = smul.addr %s231, 80
        %s233 = scalar_lea.vmem [#allocation2], %s232
        %p234 = pneg %p57
        %p235 = pneg %p54
        %p236 = pneg %p78
        %p237 = pneg %p75
        %p238 = pneg %p99
        %p239 = pneg %p96
        %p240 = pneg %p120
        %p241 = pneg %p117
        %p242 = pneg %p148
        %p243 = pneg %p145
        %s244 = sand.u32 %s135, 1
        %s245 = scalar_lea.sflag [#allocation4], %s244
        %s246 = sand.u32 %s135, 1
        %s247 = smul.addr %s246, 64
        %s248 = scalar_lea.vmem [#allocation7], %s247
        %s249 = smul.u32 8, %s27
        %v251 = vld [vmem:[%s220] sm:$0xf]
        %v252 = vld [vmem:[%s220 + $0x4] sm:$0xf]
        %v253 = vld [vmem:[%s220 + $0x8] sm:$0xf]
        %v254 = vld [vmem:[%s220 + $0xc] sm:$0xf]
        %v255 = vld [vmem:[%s220 + $0x10] sm:$0xf]
        %v256 = vld [vmem:[%s220 + $0x14] sm:$0xf]
        %v257 = vld [vmem:[%s220 + $0x18] sm:$0xf]
        %v258 = vld [vmem:[%s220 + $0x1c] sm:$0xf]
        %v259 = vld [vmem:[%s220 + $0x20] sm:$0xf]
        %v260 = vld [vmem:[%s220 + $0x24] sm:$0xf]
        %v261 = vld [vmem:[%s220 + $0x28] sm:$0xf]
        %v262 = vld [vmem:[%s220 + $0x2c] sm:$0xf]
        %v263 = vld [vmem:[%s220 + $0x30] sm:$0xf]
        %v264 = vld [vmem:[%s220 + $0x34] sm:$0xf]
        %v265 = vld [vmem:[%s220 + $0x38] sm:$0xf]
        %v266 = vld [vmem:[%s220 + $0x3c] sm:$0xf]
        %v267 = vld [vmem:[%s220 + $0x40] sm:$0xf]
        %v268 = vld [vmem:[%s220 + $0x44] sm:$0xf]
        %v269 = vld [vmem:[%s220 + $0x48] sm:$0xf]
        %v270 = vld [vmem:[%s220 + $0x4c] sm:$0xf]
        %v271 = vunpack.c.l.bf16 %v251
        %v272 = vunpack.c.l.bf16 %v252
        %v273 = vunpack.c.l.bf16 %v253
        %v274 = vunpack.c.l.bf16 %v254
        %v275 = vunpack.c.l.bf16 %v255
        %v276 = vunpack.c.l.bf16 %v256
        %v277 = vunpack.c.l.bf16 %v257
        %v278 = vunpack.c.l.bf16 %v258
        %v279 = vunpack.c.l.bf16 %v259
        %v280 = vunpack.c.l.bf16 %v260
        %v281 = vunpack.c.l.bf16 %v261
        %v282 = vunpack.c.l.bf16 %v262
        %v283 = vunpack.c.l.bf16 %v263
        %v284 = vunpack.c.l.bf16 %v264
        %v285 = vunpack.c.l.bf16 %v265
        %v286 = vunpack.c.l.bf16 %v266
        %v287 = vunpack.c.l.bf16 %v267
        %v288 = vunpack.c.l.bf16 %v268
        %v289 = vunpack.c.l.bf16 %v269
        %v290 = vunpack.c.l.bf16 %v270
        %v291 = vlaneseq
        %v292 = vshrl.u32 %v291, 7
        %v293 = vadd.s32 %v292, 8
        %v294 = vadd.s32 %v292, 16
        %v295 = vadd.s32 %v292, 24
        %v296 = vadd.s32 %v292, 32
        %v297 = vadd.s32 %v292, 40
        %v298 = vadd.s32 %v292, 48
        %v299 = vadd.s32 %v292, 56
        %v300 = vadd.s32 %v292, 64
        %v301 = vadd.s32 %v292, 72
        %v302 = vadd.s32 %v292, 80
        %v303 = vadd.s32 %v292, 88
        %v304 = vadd.s32 %v292, 96
        %v305 = vadd.s32 %v292, 104
        %v306 = vadd.s32 %v292, 112
        %v307 = vadd.s32 %v292, 120
        %v308 = vadd.s32 %v292, 128
        %v309 = vadd.s32 %v292, 136
        %v310 = vadd.s32 %v292, 144
        %v311 = vadd.s32 %v292, 152
        %vm312 = vcmp.lt.s32.totalorder %v292, 0
        %v313 = vsub.s32 0, %v292
        %v314 = vsel %vm312, %v313, %v292
        %v315 = vshrl.u32 %v314, 4
        %v316 = vand.u32 %v314, 15
        %v317 = vsub.s32 0, %v316
        %v318 = vsel %vm312, %v317, %v316
        %vm319 = vcmp.lt.s32.totalorder %v293, 0
        %v320 = vsub.s32 0, %v293
        %v321 = vsel %vm319, %v320, %v293
        %v322 = vshrl.u32 %v321, 4
        %v323 = vand.u32 %v321, 15
        %v324 = vsub.s32 0, %v323
        %v325 = vsel %vm319, %v324, %v323
        %vm326 = vcmp.lt.s32.totalorder %v294, 0
        %v327 = vsub.s32 0, %v294
        %v328 = vsel %vm326, %v327, %v294
        %v329 = vshrl.u32 %v328, 4
        %v330 = vand.u32 %v328, 15
        %v331 = vsub.s32 0, %v330
        %v332 = vsel %vm326, %v331, %v330
        %vm333 = vcmp.lt.s32.totalorder %v295, 0
        %v334 = vsub.s32 0, %v295
        %v335 = vsel %vm333, %v334, %v295
        %v336 = vshrl.u32 %v335, 4
        %v337 = vand.u32 %v335, 15
        %v338 = vsub.s32 0, %v337
        %v339 = vsel %vm333, %v338, %v337
        %vm340 = vcmp.lt.s32.totalorder %v296, 0
        %v341 = vsub.s32 0, %v296
        %v342 = vsel %vm340, %v341, %v296
        %v343 = vshrl.u32 %v342, 4
        %v344 = vand.u32 %v342, 15
        %v345 = vsub.s32 0, %v344
        %v346 = vsel %vm340, %v345, %v344
        %vm347 = vcmp.lt.s32.totalorder %v297, 0
        %v348 = vsub.s32 0, %v297
        %v349 = vsel %vm347, %v348, %v297
        %v350 = vshrl.u32 %v349, 4
        %v351 = vand.u32 %v349, 15
        %v352 = vsub.s32 0, %v351
        %v353 = vsel %vm347, %v352, %v351
        %vm354 = vcmp.lt.s32.totalorder %v298, 0
        %v355 = vsub.s32 0, %v298
        %v356 = vsel %vm354, %v355, %v298
        %v357 = vshrl.u32 %v356, 4
        %v358 = vand.u32 %v356, 15
        %v359 = vsub.s32 0, %v358
        %v360 = vsel %vm354, %v359, %v358
        %vm361 = vcmp.lt.s32.totalorder %v299, 0
        %v362 = vsub.s32 0, %v299
        %v363 = vsel %vm361, %v362, %v299
        %v364 = vshrl.u32 %v363, 4
        %v365 = vand.u32 %v363, 15
        %v366 = vsub.s32 0, %v365
        %v367 = vsel %vm361, %v366, %v365
        %vm368 = vcmp.lt.s32.totalorder %v300, 0
        %v369 = vsub.s32 0, %v300
        %v370 = vsel %vm368, %v369, %v300
        %v371 = vshrl.u32 %v370, 4
        %v372 = vand.u32 %v370, 15
        %v373 = vsub.s32 0, %v372
        %v374 = vsel %vm368, %v373, %v372
        %vm375 = vcmp.lt.s32.totalorder %v301, 0
        %v376 = vsub.s32 0, %v301
        %v377 = vsel %vm375, %v376, %v301
        %v378 = vshrl.u32 %v377, 4
        %v379 = vand.u32 %v377, 15
        %v380 = vsub.s32 0, %v379
        %v381 = vsel %vm375, %v380, %v379
        %vm382 = vcmp.lt.s32.totalorder %v302, 0
        %v383 = vsub.s32 0, %v302
        %v384 = vsel %vm382, %v383, %v302
        %v385 = vshrl.u32 %v384, 4
        %v386 = vand.u32 %v384, 15
        %v387 = vsub.s32 0, %v386
        %v388 = vsel %vm382, %v387, %v386
        %vm389 = vcmp.lt.s32.totalorder %v303, 0
        %v390 = vsub.s32 0, %v303
        %v391 = vsel %vm389, %v390, %v303
        %v392 = vshrl.u32 %v391, 4
        %v393 = vand.u32 %v391, 15
        %v394 = vsub.s32 0, %v393
        %v395 = vsel %vm389, %v394, %v393
        %vm396 = vcmp.lt.s32.totalorder %v304, 0
        %v397 = vsub.s32 0, %v304
        %v398 = vsel %vm396, %v397, %v304
        %v399 = vshrl.u32 %v398, 4
        %v400 = vand.u32 %v398, 15
        %v401 = vsub.s32 0, %v400
        %v402 = vsel %vm396, %v401, %v400
        %vm403 = vcmp.lt.s32.totalorder %v305, 0
        %v404 = vsub.s32 0, %v305
        %v405 = vsel %vm403, %v404, %v305
        %v406 = vshrl.u32 %v405, 4
        %v407 = vand.u32 %v405, 15
        %v408 = vsub.s32 0, %v407
        %v409 = vsel %vm403, %v408, %v407
        %vm410 = vcmp.lt.s32.totalorder %v306, 0
        %v411 = vsub.s32 0, %v306
        %v412 = vsel %vm410, %v411, %v306
        %v413 = vshrl.u32 %v412, 4
        %v414 = vand.u32 %v412, 15
        %v415 = vsub.s32 0, %v414
        %v416 = vsel %vm410, %v415, %v414
        %vm417 = vcmp.lt.s32.totalorder %v307, 0
        %v418 = vsub.s32 0, %v307
        %v419 = vsel %vm417, %v418, %v307
        %v420 = vshrl.u32 %v419, 4
        %v421 = vand.u32 %v419, 15
        %v422 = vsub.s32 0, %v421
        %v423 = vsel %vm417, %v422, %v421
        %vm424 = vcmp.lt.s32.totalorder %v308, 0
        %v425 = vsub.s32 0, %v308
        %v426 = vsel %vm424, %v425, %v308
        %v427 = vshrl.u32 %v426, 4
        %v428 = vand.u32 %v426, 15
        %v429 = vsub.s32 0, %v428
        %v430 = vsel %vm424, %v429, %v428
        %vm431 = vcmp.lt.s32.totalorder %v309, 0
        %v432 = vsub.s32 0, %v309
        %v433 = vsel %vm431, %v432, %v309
        %v434 = vshrl.u32 %v433, 4
        %v435 = vand.u32 %v433, 15
        %v436 = vsub.s32 0, %v435
        %v437 = vsel %vm431, %v436, %v435
        %vm438 = vcmp.lt.s32.totalorder %v310, 0
        %v439 = vsub.s32 0, %v310
        %v440 = vsel %vm438, %v439, %v310
        %v441 = vshrl.u32 %v440, 4
        %v442 = vand.u32 %v440, 15
        %v443 = vsub.s32 0, %v442
        %v444 = vsel %vm438, %v443, %v442
        %vm445 = vcmp.lt.s32.totalorder %v311, 0
        %v446 = vsub.s32 0, %v311
        %v447 = vsel %vm445, %v446, %v311
        %v448 = vshrl.u32 %v447, 4
        %v449 = vand.u32 %v447, 15
        %v450 = vsub.s32 0, %v449
        %v451 = vsel %vm445, %v450, %v449
        %vm452 = vcmp.ne.s32.totalorder %v318, 0
        %vm453 = vcmp.ne.s32.totalorder %v325, 0
        %vm454 = vcmp.ne.s32.totalorder %v332, 0
        %vm455 = vcmp.ne.s32.totalorder %v339, 0
        %vm456 = vcmp.ne.s32.totalorder %v346, 0
        %vm457 = vcmp.ne.s32.totalorder %v353, 0
        %vm458 = vcmp.ne.s32.totalorder %v360, 0
        %vm459 = vcmp.ne.s32.totalorder %v367, 0
        %vm460 = vcmp.ne.s32.totalorder %v374, 0
        %vm461 = vcmp.ne.s32.totalorder %v381, 0
        %vm462 = vcmp.ne.s32.totalorder %v388, 0
        %vm463 = vcmp.ne.s32.totalorder %v395, 0
        %vm464 = vcmp.ne.s32.totalorder %v402, 0
        %vm465 = vcmp.ne.s32.totalorder %v409, 0
        %vm466 = vcmp.ne.s32.totalorder %v416, 0
        %vm467 = vcmp.ne.s32.totalorder %v423, 0
        %vm468 = vcmp.ne.s32.totalorder %v430, 0
        %vm469 = vcmp.ne.s32.totalorder %v437, 0
        %vm470 = vcmp.ne.s32.totalorder %v444, 0
        %vm471 = vcmp.ne.s32.totalorder %v451, 0
        %vm472 = vcmp.lt.s32.totalorder %v318, 0
        %vm473 = vcmp.lt.s32.totalorder %v325, 0
        %vm474 = vcmp.lt.s32.totalorder %v332, 0
        %vm475 = vcmp.lt.s32.totalorder %v339, 0
        %vm476 = vcmp.lt.s32.totalorder %v346, 0
        %vm477 = vcmp.lt.s32.totalorder %v353, 0
        %vm478 = vcmp.lt.s32.totalorder %v360, 0
        %vm479 = vcmp.lt.s32.totalorder %v367, 0
        %vm480 = vcmp.lt.s32.totalorder %v374, 0
        %vm481 = vcmp.lt.s32.totalorder %v381, 0
        %vm482 = vcmp.lt.s32.totalorder %v388, 0
        %vm483 = vcmp.lt.s32.totalorder %v395, 0
        %vm484 = vcmp.lt.s32.totalorder %v402, 0
        %vm485 = vcmp.lt.s32.totalorder %v409, 0
        %vm486 = vcmp.lt.s32.totalorder %v416, 0
        %vm487 = vcmp.lt.s32.totalorder %v423, 0
        %vm488 = vcmp.lt.s32.totalorder %v430, 0
        %vm489 = vcmp.lt.s32.totalorder %v437, 0
        %vm490 = vcmp.lt.s32.totalorder %v444, 0
        %vm491 = vcmp.lt.s32.totalorder %v451, 0
        %vm492 = vmand %vm472, %vm452
        %vm493 = vmand %vm473, %vm453
        %vm494 = vmand %vm474, %vm454
        %vm495 = vmand %vm475, %vm455
        %vm496 = vmand %vm476, %vm456
        %vm497 = vmand %vm477, %vm457
        %vm498 = vmand %vm478, %vm458
        %vm499 = vmand %vm479, %vm459
        %vm500 = vmand %vm480, %vm460
        %vm501 = vmand %vm481, %vm461
        %vm502 = vmand %vm482, %vm462
        %vm503 = vmand %vm483, %vm463
        %vm504 = vmand %vm484, %vm464
        %vm505 = vmand %vm485, %vm465
        %vm506 = vmand %vm486, %vm466
        %vm507 = vmand %vm487, %vm467
        %vm508 = vmand %vm488, %vm468
        %vm509 = vmand %vm489, %vm469
        %vm510 = vmand %vm490, %vm470
        %vm511 = vmand %vm491, %vm471
        %v512 = vadd.s32 %v318, 16
        %v513 = vadd.s32 %v325, 16
        %v514 = vadd.s32 %v332, 16
        %v515 = vadd.s32 %v339, 16
        %v516 = vadd.s32 %v346, 16
        %v517 = vadd.s32 %v353, 16
        %v518 = vadd.s32 %v360, 16
        %v519 = vadd.s32 %v367, 16
        %v520 = vadd.s32 %v374, 16
        %v521 = vadd.s32 %v381, 16
        %v522 = vadd.s32 %v388, 16
        %v523 = vadd.s32 %v395, 16
        %v524 = vadd.s32 %v402, 16
        %v525 = vadd.s32 %v409, 16
        %v526 = vadd.s32 %v416, 16
        %v527 = vadd.s32 %v423, 16
        %v528 = vadd.s32 %v430, 16
        %v529 = vadd.s32 %v437, 16
        %v530 = vadd.s32 %v444, 16
        %v531 = vadd.s32 %v451, 16
        %v532 = vsel %vm492, %v512, %v318
        %v533 = vsel %vm493, %v513, %v325
        %v534 = vsel %vm494, %v514, %v332
        %v535 = vsel %vm495, %v515, %v339
        %v536 = vsel %vm496, %v516, %v346
        %v537 = vsel %vm497, %v517, %v353
        %v538 = vsel %vm498, %v518, %v360
        %v539 = vsel %vm499, %v519, %v367
        %v540 = vsel %vm500, %v520, %v374
        %v541 = vsel %vm501, %v521, %v381
        %v542 = vsel %vm502, %v522, %v388
        %v543 = vsel %vm503, %v523, %v395
        %v544 = vsel %vm504, %v524, %v402
        %v545 = vsel %vm505, %v525, %v409
        %v546 = vsel %vm506, %v526, %v416
        %v547 = vsel %vm507, %v527, %v423
        %v548 = vsel %vm508, %v528, %v430
        %v549 = vsel %vm509, %v529, %v437
        %v550 = vsel %vm510, %v530, %v444
        %v551 = vsel %vm511, %v531, %v451
        %vm552 = vcmp.eq.s32.totalorder %v532, 0
        %vm553 = vcmp.eq.s32.totalorder %v533, 0
        %vm554 = vcmp.eq.s32.totalorder %v534, 0
        %vm555 = vcmp.eq.s32.totalorder %v535, 0
        %vm556 = vcmp.eq.s32.totalorder %v536, 0
        %vm557 = vcmp.eq.s32.totalorder %v537, 0
        %vm558 = vcmp.eq.s32.totalorder %v538, 0
        %vm559 = vcmp.eq.s32.totalorder %v539, 0
        %vm560 = vcmp.eq.s32.totalorder %v540, 0
        %vm561 = vcmp.eq.s32.totalorder %v541, 0
        %vm562 = vcmp.eq.s32.totalorder %v542, 0
        %vm563 = vcmp.eq.s32.totalorder %v543, 0
        %vm564 = vcmp.eq.s32.totalorder %v544, 0
        %vm565 = vcmp.eq.s32.totalorder %v545, 0
        %vm566 = vcmp.eq.s32.totalorder %v546, 0
        %vm567 = vcmp.eq.s32.totalorder %v547, 0
        %vm568 = vcmp.eq.s32.totalorder %v548, 0
        %vm569 = vcmp.eq.s32.totalorder %v549, 0
        %vm570 = vcmp.eq.s32.totalorder %v550, 0
        %vm571 = vcmp.eq.s32.totalorder %v551, 0
        %v572 = vrot.slane %v271, 7
        %v573 = vrot.slane %v272, 7
        %v574 = vrot.slane %v273, 7
        %v575 = vrot.slane %v274, 7
        %v576 = vrot.slane %v275, 7
        %v577 = vrot.slane %v276, 7
        %v578 = vrot.slane %v277, 7
        %v579 = vrot.slane %v278, 7
        %v580 = vrot.slane %v279, 7
        %v581 = vrot.slane %v280, 7
        %v582 = vrot.slane %v281, 7
        %v583 = vrot.slane %v282, 7
        %v584 = vrot.slane %v283, 7
        %v585 = vrot.slane %v284, 7
        %v586 = vrot.slane %v285, 7
        %v587 = vrot.slane %v286, 7
        %v588 = vrot.slane %v287, 7
        %v589 = vrot.slane %v288, 7
        %v590 = vrot.slane %v289, 7
        %v591 = vrot.slane %v290, 7
        %vm592 = vcmp.lt.s32.totalorder %v292, 1
        %v593 = vsel %vm592, %v590, %v591
        %v594 = vsel %vm592, %v589, %v590
        %v595 = vsel %vm592, %v588, %v589
        %v596 = vsel %vm592, %v587, %v588
        %v597 = vsel %vm592, %v586, %v587
        %v598 = vsel %vm592, %v585, %v586
        %v599 = vsel %vm592, %v584, %v585
        %v600 = vsel %vm592, %v583, %v584
        %v601 = vsel %vm592, %v582, %v583
        %v602 = vsel %vm592, %v581, %v582
        %v603 = vsel %vm592, %v580, %v581
        %v604 = vsel %vm592, %v579, %v580
        %v605 = vsel %vm592, %v578, %v579
        %v606 = vsel %vm592, %v577, %v578
        %v607 = vsel %vm592, %v576, %v577
        %v608 = vsel %vm592, %v575, %v576
        %v609 = vsel %vm592, %v574, %v575
        %v610 = vsel %vm592, %v573, %v574
        %v611 = vsel %vm592, %v572, %v573
        %v612 = vsel %vm592, %v591, %v572
        %v613 = vsel %vm552, 0.0, %v612
        %v614 = vsel %vm553, 0.0, %v611
        %v615 = vsel %vm554, 0.0, %v610
        %v616 = vsel %vm555, 0.0, %v609
        %v617 = vsel %vm556, 0.0, %v608
        %v618 = vsel %vm557, 0.0, %v607
        %v619 = vsel %vm558, 0.0, %v606
        %v620 = vsel %vm559, 0.0, %v605
        %v621 = vsel %vm560, 0.0, %v604
        %v622 = vsel %vm561, 0.0, %v603
        %v623 = vsel %vm562, 0.0, %v602
        %v624 = vsel %vm563, 0.0, %v601
        %v625 = vsel %vm564, 0.0, %v600
        %v626 = vsel %vm565, 0.0, %v599
        %v627 = vsel %vm566, 0.0, %v598
        %v628 = vsel %vm567, 0.0, %v597
        %v629 = vsel %vm568, 0.0, %v596
        %v630 = vsel %vm569, 0.0, %v595
        %v631 = vsel %vm570, 0.0, %v594
        %v632 = vsel %vm571, 0.0, %v593
        %v633 = vpack.c.bf16 %v614, %v613
        %v634 = vpack.c.bf16 %v616, %v615
        %v635 = vpack.c.bf16 %v618, %v617
        %v636 = vpack.c.bf16 %v620, %v619
        %v637 = vpack.c.bf16 %v622, %v621
        %v638 = vpack.c.bf16 %v624, %v623
        %v639 = vpack.c.bf16 %v626, %v625
        %v640 = vpack.c.bf16 %v628, %v627
        %v641 = vpack.c.bf16 %v630, %v629
        %v642 = vpack.c.bf16 %v632, %v631
        %vm643 = vcmp.eq.s32.totalorder %v532, 15
        %vm644 = vcmp.eq.s32.totalorder %v533, 15
        %vm645 = vcmp.eq.s32.totalorder %v534, 15
        %vm646 = vcmp.eq.s32.totalorder %v535, 15
        %vm647 = vcmp.eq.s32.totalorder %v536, 15
        %vm648 = vcmp.eq.s32.totalorder %v537, 15
        %vm649 = vcmp.eq.s32.totalorder %v538, 15
        %vm650 = vcmp.eq.s32.totalorder %v539, 15
        %vm651 = vcmp.eq.s32.totalorder %v540, 15
        %vm652 = vcmp.eq.s32.totalorder %v541, 15
        %vm653 = vcmp.eq.s32.totalorder %v542, 15
        %vm654 = vcmp.eq.s32.totalorder %v543, 15
        %vm655 = vcmp.eq.s32.totalorder %v544, 15
        %vm656 = vcmp.eq.s32.totalorder %v545, 15
        %vm657 = vcmp.eq.s32.totalorder %v546, 15
        %vm658 = vcmp.eq.s32.totalorder %v547, 15
        %vm659 = vcmp.eq.s32.totalorder %v548, 15
        %vm660 = vcmp.eq.s32.totalorder %v549, 15
        %vm661 = vcmp.eq.s32.totalorder %v550, 15
        %vm662 = vcmp.eq.s32.totalorder %v551, 15
        %v663 = vrot.slane %v271, 1
        %v664 = vrot.slane %v272, 1
        %v665 = vrot.slane %v273, 1
        %v666 = vrot.slane %v274, 1
        %v667 = vrot.slane %v275, 1
        %v668 = vrot.slane %v276, 1
        %v669 = vrot.slane %v277, 1
        %v670 = vrot.slane %v278, 1
        %v671 = vrot.slane %v279, 1
        %v672 = vrot.slane %v280, 1
        %v673 = vrot.slane %v281, 1
        %v674 = vrot.slane %v282, 1
        %v675 = vrot.slane %v283, 1
        %v676 = vrot.slane %v284, 1
        %v677 = vrot.slane %v285, 1
        %v678 = vrot.slane %v286, 1
        %v679 = vrot.slane %v287, 1
        %v680 = vrot.slane %v288, 1
        %v681 = vrot.slane %v289, 1
        %v682 = vrot.slane %v290, 1
        %vm683 = vcmp.lt.s32.totalorder %v292, 7
        %v684 = vsel %vm683, %v681, %v682
        %v685 = vsel %vm683, %v680, %v681
        %v686 = vsel %vm683, %v679, %v680
        %v687 = vsel %vm683, %v678, %v679
        %v688 = vsel %vm683, %v677, %v678
        %v689 = vsel %vm683, %v676, %v677
        %v690 = vsel %vm683, %v675, %v676
        %v691 = vsel %vm683, %v674, %v675
        %v692 = vsel %vm683, %v673, %v674
        %v693 = vsel %vm683, %v672, %v673
        %v694 = vsel %vm683, %v671, %v672
        %v695 = vsel %vm683, %v670, %v671
        %v696 = vsel %vm683, %v669, %v670
        %v697 = vsel %vm683, %v668, %v669
        %v698 = vsel %vm683, %v667, %v668
        %v699 = vsel %vm683, %v666, %v667
        %v700 = vsel %vm683, %v665, %v666
        %v701 = vsel %vm683, %v664, %v665
        %v702 = vsel %vm683, %v663, %v664
        %v703 = vsel %vm683, %v682, %v663
        %v704 = vsel %vm643, 0.0, %v702
        %v705 = vsel %vm644, 0.0, %v701
        %v706 = vsel %vm645, 0.0, %v700
        %v707 = vsel %vm646, 0.0, %v699
        %v708 = vsel %vm647, 0.0, %v698
        %v709 = vsel %vm648, 0.0, %v697
        %v710 = vsel %vm649, 0.0, %v696
        %v711 = vsel %vm650, 0.0, %v695
        %v712 = vsel %vm651, 0.0, %v694
        %v713 = vsel %vm652, 0.0, %v693
        %v714 = vsel %vm653, 0.0, %v692
        %v715 = vsel %vm654, 0.0, %v691
        %v716 = vsel %vm655, 0.0, %v690
        %v717 = vsel %vm656, 0.0, %v689
        %v718 = vsel %vm657, 0.0, %v688
        %v719 = vsel %vm658, 0.0, %v687
        %v720 = vsel %vm659, 0.0, %v686
        %v721 = vsel %vm660, 0.0, %v685
        %v722 = vsel %vm661, 0.0, %v684
        %v723 = vsel %vm662, 0.0, %v703
        %v724 = vpack.c.bf16 %v705, %v704
        %v725 = vpack.c.bf16 %v707, %v706
        %v726 = vpack.c.bf16 %v709, %v708
        %v727 = vpack.c.bf16 %v711, %v710
        %v728 = vpack.c.bf16 %v713, %v712
        %v729 = vpack.c.bf16 %v715, %v714
        %v730 = vpack.c.bf16 %v717, %v716
        %v731 = vpack.c.bf16 %v719, %v718
        %v732 = vpack.c.bf16 %v721, %v720
        %v733 = vpack.c.bf16 %v723, %v722
        %v734 = vld [vmem:[#allocation5] sm:$0xf]
        %v735 = vld [vmem:[#allocation5 + $0x4] sm:$0xf]
        %v736 = vld [vmem:[#allocation5 + $0x8] sm:$0xf]
        %v737 = vld [vmem:[#allocation5 + $0xc] sm:$0xf]
        %v738 = vld [vmem:[#allocation5 + $0x10] sm:$0xf]
        %v739 = vld [vmem:[#allocation5 + $0x14] sm:$0xf]
        %v740 = vld [vmem:[#allocation5 + $0x18] sm:$0xf]
        %v741 = vld [vmem:[#allocation5 + $0x1c] sm:$0xf]
        %v742 = vld [vmem:[#allocation5 + $0x20] sm:$0xf]
        %v743 = vld [vmem:[#allocation5 + $0x24] sm:$0xf]
        %v744 = vld [vmem:[#allocation5 + $0x28] sm:$0xf]
        %v745 = vld [vmem:[#allocation5 + $0x2c] sm:$0xf]
        %v746 = vld [vmem:[#allocation5 + $0x30] sm:$0xf]
        %v747 = vld [vmem:[#allocation5 + $0x34] sm:$0xf]
        %v748 = vld [vmem:[#allocation5 + $0x38] sm:$0xf]
        %v749 = vld [vmem:[#allocation5 + $0x3c] sm:$0xf]
        %s750 = scalar_lea.vmem [#allocation5], 64
        %v751 = vld [vmem:[%s750] sm:$0xf]
        %v752 = vld [vmem:[%s750 + $0x4] sm:$0xf]
        %v753 = vld [vmem:[%s750 + $0x8] sm:$0xf]
        %v754 = vld [vmem:[%s750 + $0xc] sm:$0xf]
        %v755 = vld [vmem:[%s750 + $0x10] sm:$0xf]
        %v756 = vld [vmem:[%s750 + $0x14] sm:$0xf]
        %v757 = vld [vmem:[%s750 + $0x18] sm:$0xf]
        %v758 = vld [vmem:[%s750 + $0x1c] sm:$0xf]
        %v759 = vld [vmem:[%s750 + $0x20] sm:$0xf]
        %v760 = vld [vmem:[%s750 + $0x24] sm:$0xf]
        %v761 = vld [vmem:[%s750 + $0x28] sm:$0xf]
        %v762 = vld [vmem:[%s750 + $0x2c] sm:$0xf]
        %v763 = vld [vmem:[%s750 + $0x30] sm:$0xf]
        %v764 = vld [vmem:[%s750 + $0x34] sm:$0xf]
        %v765 = vld [vmem:[%s750 + $0x38] sm:$0xf]
        %v766 = vld [vmem:[%s750 + $0x3c] sm:$0xf]
        %v783 = vunpack.c.l.b16 %v251
        %v784 = vunpack.c.l.b16 %v252
        %v785 = vunpack.c.l.b16 %v253
        %v786 = vunpack.c.l.b16 %v254
        %v787 = vunpack.c.l.b16 %v255
        %v788 = vunpack.c.l.b16 %v256
        %v789 = vunpack.c.l.b16 %v257
        %v790 = vunpack.c.l.b16 %v258
        %v791 = vunpack.c.l.b16 %v259
        %v792 = vunpack.c.l.b16 %v260
        %v793 = vunpack.c.l.b16 %v261
        %v794 = vunpack.c.l.b16 %v262
        %v795 = vunpack.c.l.b16 %v263
        %v796 = vunpack.c.l.b16 %v264
        %v797 = vunpack.c.l.b16 %v265
        %v798 = vunpack.c.l.b16 %v266
        %v799 = vpack.c.b16 %v784, %v783
        %v800 = vpack.c.b16 %v786, %v785
        %v801 = vpack.c.b16 %v788, %v787
        %v802 = vpack.c.b16 %v790, %v789
        %v803 = vpack.c.b16 %v792, %v791
        %v804 = vpack.c.b16 %v794, %v793
        %v805 = vpack.c.b16 %v796, %v795
        %v806 = vpack.c.b16 %v798, %v797
        %v831 = vunpack.c.l.b16 %v751
        %v832 = vunpack.c.l.b16 %v752
        %v833 = vunpack.c.l.b16 %v753
        %v834 = vunpack.c.l.b16 %v754
        %v835 = vunpack.c.l.b16 %v755
        %v836 = vunpack.c.l.b16 %v756
        %v837 = vunpack.c.l.b16 %v757
        %v838 = vunpack.c.l.b16 %v758
        %v839 = vunpack.c.l.b16 %v759
        %v840 = vunpack.c.l.b16 %v760
        %v841 = vunpack.c.l.b16 %v761
        %v842 = vunpack.c.l.b16 %v762
        %v843 = vunpack.c.l.b16 %v763
        %v844 = vunpack.c.l.b16 %v764
        %v845 = vunpack.c.l.b16 %v765
        %v846 = vunpack.c.l.b16 %v766
        %v847 = vpack.c.b16 %v832, %v831
        %v848 = vpack.c.b16 %v834, %v833
        %v849 = vpack.c.b16 %v836, %v835
        %v850 = vpack.c.b16 %v838, %v837
        %v851 = vpack.c.b16 %v840, %v839
        %v852 = vpack.c.b16 %v842, %v841
        %v853 = vpack.c.b16 %v844, %v843
        %v854 = vpack.c.b16 %v846, %v845
        %863 = vmatprep.subr.bf16.mxu0 0
        %864 = vmatpush1.bf16.msra.mxu0 %v847
        %865 = vmatprep.subr.bf16.mxu0 0
        %866 = vmatpush1.bf16.msra.mxu0 %v848
        %867 = vmatprep.subr.bf16.mxu0 0
        %868 = vmatpush1.bf16.msra.mxu0 %v849
        %869 = vmatprep.subr.bf16.mxu0 0
        %870 = vmatpush1.bf16.msra.mxu0 %v850
        %871 = vmatprep.subr.bf16.mxu0 0
        %872 = vmatpush1.bf16.msra.mxu0 %v851
        %873 = vmatprep.subr.bf16.mxu0 0
        %874 = vmatpush1.bf16.msra.mxu0 %v852
        %875 = vmatprep.subr.bf16.mxu0 0
        %876 = vmatpush1.bf16.msra.mxu0 %v853
        %877 = vmatprep.subr.bf16.mxu0 0
        %878 = vmatpush1.bf16.msra.mxu0 %v854
        %879 = vmatprep.subr.bf16.mxu0 0
        %880 = vmatpush1.bf16.msra.mxu0 0
        %881 = vmatprep.subr.bf16.mxu0 0
        %882 = vmatpush1.bf16.msra.mxu0 0
        %883 = vmatprep.subr.bf16.mxu0 0
        %884 = vmatpush1.bf16.msra.mxu0 0
        %885 = vmatprep.subr.bf16.mxu0 0
        %886 = vmatpush1.bf16.msra.mxu0 0
        %887 = vmatprep.subr.bf16.mxu0 0
        %888 = vmatpush1.bf16.msra.mxu0 0
        %889 = vmatprep.subr.bf16.mxu0 0
        %890 = vmatpush1.bf16.msra.mxu0 0
        %891 = vmatprep.subr.bf16.mxu0 0
        %892 = vmatpush1.bf16.msra.mxu0 0
        %893 = vmatprep.subr.bf16.mxu0 0
        %894 = vmatpush1.bf16.msra.mxu0 0
        %895 = vmatprep.mubr.bf16.mxu0 0
        %896 = vmatmul.mubr.bf16.gmra.mrb[0].mxu0 %v799
        %v897 = vpop.f32.mrb[0].mxu0
        %v898 = vadd.f32 0.0, %v897
        %v899 = vpop.f32.mrb[0].mxu0
        %v900 = vpop.f32.mrb[0].mxu0
        %v901 = vadd.f32 0.0, %v900
        %v902 = vpop.f32.mrb[0].mxu0
        %903 = vmatprep.mubr.bf16.mxu0 0
        %904 = vmatmul.mubr.bf16.gmra.mrb[0].mxu0 %v800
        %v905 = vpop.f32.mrb[0].mxu0
        %v906 = vadd.f32 0.0, %v905
        %v907 = vpop.f32.mrb[0].mxu0
        %v908 = vpop.f32.mrb[0].mxu0
        %v909 = vadd.f32 0.0, %v908
        %v910 = vpop.f32.mrb[0].mxu0
        %911 = vmatprep.mubr.bf16.mxu0 0
        %912 = vmatmul.mubr.bf16.gmra.mrb[0].mxu0 %v801
        %v913 = vpop.f32.mrb[0].mxu0
        %v914 = vadd.f32 0.0, %v913
        %v915 = vpop.f32.mrb[0].mxu0
        %v916 = vpop.f32.mrb[0].mxu0
        %v917 = vadd.f32 0.0, %v916
        %v918 = vpop.f32.mrb[0].mxu0
        %919 = vmatprep.mubr.bf16.mxu0 0
        %920 = vmatmul.mubr.bf16.gmra.mrb[0].mxu0 %v802
        %v921 = vpop.f32.mrb[0].mxu0
        %v922 = vadd.f32 0.0, %v921
        %v923 = vpop.f32.mrb[0].mxu0
        %v924 = vpop.f32.mrb[0].mxu0
        %v925 = vadd.f32 0.0, %v924
        %v926 = vpop.f32.mrb[0].mxu0
        %927 = vmatprep.mubr.bf16.mxu0 0
        %928 = vmatmul.mubr.bf16.gmra.mrb[0].mxu0 %v803
        %v929 = vpop.f32.mrb[0].mxu0
        %v930 = vadd.f32 0.0, %v929
        %v931 = vpop.f32.mrb[0].mxu0
        %v932 = vpop.f32.mrb[0].mxu0
        %v933 = vadd.f32 0.0, %v932
        %v934 = vpop.f32.mrb[0].mxu0
        %935 = vmatprep.mubr.bf16.mxu0 0
        %936 = vmatmul.mubr.bf16.gmra.mrb[0].mxu0 %v804
        %v937 = vpop.f32.mrb[0].mxu0
        %v938 = vadd.f32 0.0, %v937
        %v939 = vpop.f32.mrb[0].mxu0
        %v940 = vpop.f32.mrb[0].mxu0
        %v941 = vadd.f32 0.0, %v940
        %v942 = vpop.f32.mrb[0].mxu0
        %943 = vmatprep.mubr.bf16.mxu0 0
        %944 = vmatmul.mubr.bf16.gmra.mrb[0].mxu0 %v805
        %v945 = vpop.f32.mrb[0].mxu0
        %v946 = vadd.f32 0.0, %v945
        %v947 = vpop.f32.mrb[0].mxu0
        %v948 = vpop.f32.mrb[0].mxu0
        %v949 = vadd.f32 0.0, %v948
        %v950 = vpop.f32.mrb[0].mxu0
        %951 = vmatprep.mubr.bf16.mxu0 0
        %952 = vmatmul.mubr.bf16.gmra.mrb[0].mxu0 %v806
        %v953 = vpop.f32.mrb[0].mxu0
        %v954 = vadd.f32 0.0, %v953
        %v955 = vpop.f32.mrb[0].mxu0
        %v956 = vpop.f32.mrb[0].mxu0
        %v957 = vadd.f32 0.0, %v956
        %v958 = vpop.f32.mrb[0].mxu0
        %959 = vdwg.mxu0
        %v976 = vunpack.c.l.b16 %v734
        %v977 = vunpack.c.l.b16 %v735
        %v978 = vunpack.c.l.b16 %v736
        %v979 = vunpack.c.l.b16 %v737
        %v980 = vunpack.c.l.b16 %v738
        %v981 = vunpack.c.l.b16 %v739
        %v982 = vunpack.c.l.b16 %v740
        %v983 = vunpack.c.l.b16 %v741
        %v984 = vunpack.c.l.b16 %v742
        %v985 = vunpack.c.l.b16 %v743
        %v986 = vunpack.c.l.b16 %v744
        %v987 = vunpack.c.l.b16 %v745
        %v988 = vunpack.c.l.b16 %v746
        %v989 = vunpack.c.l.b16 %v747
        %v990 = vunpack.c.l.b16 %v748
        %v991 = vunpack.c.l.b16 %v749
        %v992 = vpack.c.b16 %v977, %v976
        %v993 = vpack.c.b16 %v979, %v978
        %v994 = vpack.c.b16 %v981, %v980
        %v995 = vpack.c.b16 %v983, %v982
        %v996 = vpack.c.b16 %v985, %v984
        %v997 = vpack.c.b16 %v987, %v986
        %v998 = vpack.c.b16 %v989, %v988
        %v999 = vpack.c.b16 %v991, %v990
        %1008 = vmatprep.subr.bf16.mxu0 0
        %1009 = vmatpush1.bf16.msra.mxu0 %v992
        %1010 = vmatprep.subr.bf16.mxu0 0
        %1011 = vmatpush1.bf16.msra.mxu0 %v993
        %1012 = vmatprep.subr.bf16.mxu0 0
        %1013 = vmatpush1.bf16.msra.mxu0 %v994
        %1014 = vmatprep.subr.bf16.mxu0 0
        %1015 = vmatpush1.bf16.msra.mxu0 %v995
        %1016 = vmatprep.subr.bf16.mxu0 0
        %1017 = vmatpush1.bf16.msra.mxu0 %v996
        %1018 = vmatprep.subr.bf16.mxu0 0
        %1019 = vmatpush1.bf16.msra.mxu0 %v997
        %1020 = vmatprep.subr.bf16.mxu0 0
        %1021 = vmatpush1.bf16.msra.mxu0 %v998
        %1022 = vmatprep.subr.bf16.mxu0 0
        %1023 = vmatpush1.bf16.msra.mxu0 %v999
        %1024 = vmatprep.subr.bf16.mxu0 0
        %1025 = vmatpush1.bf16.msra.mxu0 0
        %1026 = vmatprep.subr.bf16.mxu0 0
        %1027 = vmatpush1.bf16.msra.mxu0 0
        %1028 = vmatprep.subr.bf16.mxu0 0
        %1029 = vmatpush1.bf16.msra.mxu0 0
        %1030 = vmatprep.subr.bf16.mxu0 0
        %1031 = vmatpush1.bf16.msra.mxu0 0
        %1032 = vmatprep.subr.bf16.mxu0 0
        %1033 = vmatpush1.bf16.msra.mxu0 0
        %1034 = vmatprep.subr.bf16.mxu0 0
        %1035 = vmatpush1.bf16.msra.mxu0 0
        %1036 = vmatprep.subr.bf16.mxu0 0
        %1037 = vmatpush1.bf16.msra.mxu0 0
        %1038 = vmatprep.subr.bf16.mxu0 0
        %1039 = vmatpush1.bf16.msra.mxu0 0
        %1040 = vmatprep.mubr.bf16.mxu0 0
        %1041 = vmatmul.mubr.bf16.gmra.mrb[0].mxu0 %v633
        %v1042 = vpop.f32.mrb[0].mxu0
        %v1043 = vadd.f32 %v898, %v1042
        %v1044 = vpop.f32.mrb[0].mxu0
        %v1045 = vpop.f32.mrb[0].mxu0
        %v1046 = vadd.f32 %v901, %v1045
        %v1047 = vpop.f32.mrb[0].mxu0
        %1048 = vmatprep.mubr.bf16.mxu0 0
        %1049 = vmatmul.mubr.bf16.gmra.mrb[0].mxu0 %v634
        %v1050 = vpop.f32.mrb[0].mxu0
        %v1051 = vadd.f32 %v906, %v1050
        %v1052 = vpop.f32.mrb[0].mxu0
        %v1053 = vpop.f32.mrb[0].mxu0
        %v1054 = vadd.f32 %v909, %v1053
        %v1055 = vpop.f32.mrb[0].mxu0
        %1056 = vmatprep.mubr.bf16.mxu0 0
        %1057 = vmatmul.mubr.bf16.gmra.mrb[0].mxu0 %v635
        %v1058 = vpop.f32.mrb[0].mxu0
        %v1059 = vadd.f32 %v914, %v1058
        %v1060 = vpop.f32.mrb[0].mxu0
        %v1061 = vpop.f32.mrb[0].mxu0
        %v1062 = vadd.f32 %v917, %v1061
        %v1063 = vpop.f32.mrb[0].mxu0
        %1064 = vmatprep.mubr.bf16.mxu0 0
        %1065 = vmatmul.mubr.bf16.gmra.mrb[0].mxu0 %v636
        %v1066 = vpop.f32.mrb[0].mxu0
        %v1067 = vadd.f32 %v922, %v1066
        %v1068 = vpop.f32.mrb[0].mxu0
        %v1069 = vpop.f32.mrb[0].mxu0
        %v1070 = vadd.f32 %v925, %v1069
        %v1071 = vpop.f32.mrb[0].mxu0
        %1072 = vmatprep.mubr.bf16.mxu0 0
        %1073 = vmatmul.mubr.bf16.gmra.mrb[0].mxu0 %v637
        %v1074 = vpop.f32.mrb[0].mxu0
        %v1075 = vadd.f32 %v930, %v1074
        %v1076 = vpop.f32.mrb[0].mxu0
        %v1077 = vpop.f32.mrb[0].mxu0
        %v1078 = vadd.f32 %v933, %v1077
        %v1079 = vpop.f32.mrb[0].mxu0
        %1080 = vmatprep.mubr.bf16.mxu0 0
        %1081 = vmatmul.mubr.bf16.gmra.mrb[0].mxu0 %v638
        %v1082 = vpop.f32.mrb[0].mxu0
        %v1083 = vadd.f32 %v938, %v1082
        %v1084 = vpop.f32.mrb[0].mxu0
        %v1085 = vpop.f32.mrb[0].mxu0
        %v1086 = vadd.f32 %v941, %v1085
        %v1087 = vpop.f32.mrb[0].mxu0
        %1088 = vmatprep.mubr.bf16.mxu0 0
        %1089 = vmatmul.mubr.bf16.gmra.mrb[0].mxu0 %v639
        %v1090 = vpop.f32.mrb[0].mxu0
        %v1091 = vadd.f32 %v946, %v1090
        %v1092 = vpop.f32.mrb[0].mxu0
        %v1093 = vpop.f32.mrb[0].mxu0
        %v1094 = vadd.f32 %v949, %v1093
        %v1095 = vpop.f32.mrb[0].mxu0
        %1096 = vmatprep.mubr.bf16.mxu0 0
        %1097 = vmatmul.mubr.bf16.gmra.mrb[0].mxu0 %v640
        %v1098 = vpop.f32.mrb[0].mxu0
        %v1099 = vadd.f32 %v954, %v1098
        %v1100 = vpop.f32.mrb[0].mxu0
        %v1101 = vpop.f32.mrb[0].mxu0
        %v1102 = vadd.f32 %v957, %v1101
        %v1103 = vpop.f32.mrb[0].mxu0
        %1104 = vdwg.mxu0
        %s1105 = scalar_lea.vmem [#allocation5], 128
        %v1106 = vld [vmem:[%s1105] sm:$0xf]
        %v1107 = vld [vmem:[%s1105 + $0x4] sm:$0xf]
        %v1108 = vld [vmem:[%s1105 + $0x8] sm:$0xf]
        %v1109 = vld [vmem:[%s1105 + $0xc] sm:$0xf]
        %v1110 = vld [vmem:[%s1105 + $0x10] sm:$0xf]
        %v1111 = vld [vmem:[%s1105 + $0x14] sm:$0xf]
        %v1112 = vld [vmem:[%s1105 + $0x18] sm:$0xf]
        %v1113 = vld [vmem:[%s1105 + $0x1c] sm:$0xf]
        %v1114 = vld [vmem:[%s1105 + $0x20] sm:$0xf]
        %v1115 = vld [vmem:[%s1105 + $0x24] sm:$0xf]
        %v1116 = vld [vmem:[%s1105 + $0x28] sm:$0xf]
        %v1117 = vld [vmem:[%s1105 + $0x2c] sm:$0xf]
        %v1118 = vld [vmem:[%s1105 + $0x30] sm:$0xf]
        %v1119 = vld [vmem:[%s1105 + $0x34] sm:$0xf]
        %v1120 = vld [vmem:[%s1105 + $0x38] sm:$0xf]
        %v1121 = vld [vmem:[%s1105 + $0x3c] sm:$0xf]
        %v1138 = vunpack.c.l.b16 %v1106
        %v1139 = vunpack.c.l.b16 %v1107
        %v1140 = vunpack.c.l.b16 %v1108
        %v1141 = vunpack.c.l.b16 %v1109
        %v1142 = vunpack.c.l.b16 %v1110
        %v1143 = vunpack.c.l.b16 %v1111
        %v1144 = vunpack.c.l.b16 %v1112
        %v1145 = vunpack.c.l.b16 %v1113
        %v1146 = vunpack.c.l.b16 %v1114
        %v1147 = vunpack.c.l.b16 %v1115
        %v1148 = vunpack.c.l.b16 %v1116
        %v1149 = vunpack.c.l.b16 %v1117
        %v1150 = vunpack.c.l.b16 %v1118
        %v1151 = vunpack.c.l.b16 %v1119
        %v1152 = vunpack.c.l.b16 %v1120
        %v1153 = vunpack.c.l.b16 %v1121
        %v1154 = vpack.c.b16 %v1139, %v1138
        %v1155 = vpack.c.b16 %v1141, %v1140
        %v1156 = vpack.c.b16 %v1143, %v1142
        %v1157 = vpack.c.b16 %v1145, %v1144
        %v1158 = vpack.c.b16 %v1147, %v1146
        %v1159 = vpack.c.b16 %v1149, %v1148
        %v1160 = vpack.c.b16 %v1151, %v1150
        %v1161 = vpack.c.b16 %v1153, %v1152
        %1170 = vmatprep.subr.bf16.mxu0 0
        %1171 = vmatpush1.bf16.msra.mxu0 %v1154
        %1172 = vmatprep.subr.bf16.mxu0 0
        %1173 = vmatpush1.bf16.msra.mxu0 %v1155
        %1174 = vmatprep.subr.bf16.mxu0 0
        %1175 = vmatpush1.bf16.msra.mxu0 %v1156
        %1176 = vmatprep.subr.bf16.mxu0 0
        %1177 = vmatpush1.bf16.msra.mxu0 %v1157
        %1178 = vmatprep.subr.bf16.mxu0 0
        %1179 = vmatpush1.bf16.msra.mxu0 %v1158
        %1180 = vmatprep.subr.bf16.mxu0 0
        %1181 = vmatpush1.bf16.msra.mxu0 %v1159
        %1182 = vmatprep.subr.bf16.mxu0 0
        %1183 = vmatpush1.bf16.msra.mxu0 %v1160
        %1184 = vmatprep.subr.bf16.mxu0 0
        %1185 = vmatpush1.bf16.msra.mxu0 %v1161
        %1186 = vmatprep.subr.bf16.mxu0 0
        %1187 = vmatpush1.bf16.msra.mxu0 0
        %1188 = vmatprep.subr.bf16.mxu0 0
        %1189 = vmatpush1.bf16.msra.mxu0 0
        %1190 = vmatprep.subr.bf16.mxu0 0
        %1191 = vmatpush1.bf16.msra.mxu0 0
        %1192 = vmatprep.subr.bf16.mxu0 0
        %1193 = vmatpush1.bf16.msra.mxu0 0
        %1194 = vmatprep.subr.bf16.mxu0 0
        %1195 = vmatpush1.bf16.msra.mxu0 0
        %1196 = vmatprep.subr.bf16.mxu0 0
        %1197 = vmatpush1.bf16.msra.mxu0 0
        %1198 = vmatprep.subr.bf16.mxu0 0
        %1199 = vmatpush1.bf16.msra.mxu0 0
        %1200 = vmatprep.subr.bf16.mxu0 0
        %1201 = vmatpush1.bf16.msra.mxu0 0
        %1202 = vmatprep.mubr.bf16.mxu0 0
        %1203 = vmatmul.mubr.bf16.gmra.mrb[0].mxu0 %v724
        %v1204 = vpop.f32.mrb[0].mxu0
        %v1205 = vadd.f32 0.0, %v1204
        %v1206 = vpop.f32.mrb[0].mxu0
        %v1207 = vpop.f32.mrb[0].mxu0
        %v1208 = vadd.f32 0.0, %v1207
        %v1209 = vpop.f32.mrb[0].mxu0
        %1210 = vmatprep.mubr.bf16.mxu0 0
        %1211 = vmatmul.mubr.bf16.gmra.mrb[0].mxu0 %v725
        %v1212 = vpop.f32.mrb[0].mxu0
        %v1213 = vadd.f32 0.0, %v1212
        %v1214 = vpop.f32.mrb[0].mxu0
        %v1215 = vpop.f32.mrb[0].mxu0
        %v1216 = vadd.f32 0.0, %v1215
        %v1217 = vpop.f32.mrb[0].mxu0
        %1218 = vmatprep.mubr.bf16.mxu0 0
        %1219 = vmatmul.mubr.bf16.gmra.mrb[0].mxu0 %v726
        %v1220 = vpop.f32.mrb[0].mxu0
        %v1221 = vadd.f32 0.0, %v1220
        %v1222 = vpop.f32.mrb[0].mxu0
        %v1223 = vpop.f32.mrb[0].mxu0
        %v1224 = vadd.f32 0.0, %v1223
        %v1225 = vpop.f32.mrb[0].mxu0
        %1226 = vmatprep.mubr.bf16.mxu0 0
        %1227 = vmatmul.mubr.bf16.gmra.mrb[0].mxu0 %v727
        %v1228 = vpop.f32.mrb[0].mxu0
        %v1229 = vadd.f32 0.0, %v1228
        %v1230 = vpop.f32.mrb[0].mxu0
        %v1231 = vpop.f32.mrb[0].mxu0
        %v1232 = vadd.f32 0.0, %v1231
        %v1233 = vpop.f32.mrb[0].mxu0
        %1234 = vmatprep.mubr.bf16.mxu0 0
        %1235 = vmatmul.mubr.bf16.gmra.mrb[0].mxu0 %v728
        %v1236 = vpop.f32.mrb[0].mxu0
        %v1237 = vadd.f32 0.0, %v1236
        %v1238 = vpop.f32.mrb[0].mxu0
        %v1239 = vpop.f32.mrb[0].mxu0
        %v1240 = vadd.f32 0.0, %v1239
        %v1241 = vpop.f32.mrb[0].mxu0
        %1242 = vmatprep.mubr.bf16.mxu0 0
        %1243 = vmatmul.mubr.bf16.gmra.mrb[0].mxu0 %v729
        %v1244 = vpop.f32.mrb[0].mxu0
        %v1245 = vadd.f32 0.0, %v1244
        %v1246 = vpop.f32.mrb[0].mxu0
        %v1247 = vpop.f32.mrb[0].mxu0
        %v1248 = vadd.f32 0.0, %v1247
        %v1249 = vpop.f32.mrb[0].mxu0
        %1250 = vmatprep.mubr.bf16.mxu0 0
        %1251 = vmatmul.mubr.bf16.gmra.mrb[0].mxu0 %v730
        %v1252 = vpop.f32.mrb[0].mxu0
        %v1253 = vadd.f32 0.0, %v1252
        %v1254 = vpop.f32.mrb[0].mxu0
        %v1255 = vpop.f32.mrb[0].mxu0
        %v1256 = vadd.f32 0.0, %v1255
        %v1257 = vpop.f32.mrb[0].mxu0
        %1258 = vmatprep.mubr.bf16.mxu0 0
        %1259 = vmatmul.mubr.bf16.gmra.mrb[0].mxu0 %v731
        %v1260 = vpop.f32.mrb[0].mxu0
        %v1261 = vadd.f32 0.0, %v1260
        %v1262 = vpop.f32.mrb[0].mxu0
        %v1263 = vpop.f32.mrb[0].mxu0
        %v1264 = vadd.f32 0.0, %v1263
        %v1265 = vpop.f32.mrb[0].mxu0
        %1266 = vdwg.mxu0
        %v1267 = vadd.f32 %v1043, %v1205
        %v1268 = vadd.f32 %v1046, %v1208
        %v1269 = vadd.f32 %v1051, %v1213
        %v1270 = vadd.f32 %v1054, %v1216
        %v1271 = vadd.f32 %v1059, %v1221
        %v1272 = vadd.f32 %v1062, %v1224
        %v1273 = vadd.f32 %v1067, %v1229
        %v1274 = vadd.f32 %v1070, %v1232
        %v1275 = vadd.f32 %v1075, %v1237
        %v1276 = vadd.f32 %v1078, %v1240
        %v1277 = vadd.f32 %v1083, %v1245
        %v1278 = vadd.f32 %v1086, %v1248
        %v1279 = vadd.f32 %v1091, %v1253
        %v1280 = vadd.f32 %v1094, %v1256
        %v1281 = vadd.f32 %v1099, %v1261
        %v1282 = vadd.f32 %v1102, %v1264
        %s1283 = scalar_lea.vmem [#allocation5], 192
        %v1284 = vld [vmem:[%s1283] sm:$0xf]
        %v1285 = vld [vmem:[%s1283 + $0x4] sm:$0xf]
        %v1286 = vld [vmem:[%s1283 + $0x8] sm:$0xf]
        %v1287 = vld [vmem:[%s1283 + $0xc] sm:$0xf]
        %v1288 = vld [vmem:[%s1283 + $0x10] sm:$0xf]
        %v1289 = vld [vmem:[%s1283 + $0x14] sm:$0xf]
        %v1290 = vld [vmem:[%s1283 + $0x18] sm:$0xf]
        %v1291 = vld [vmem:[%s1283 + $0x1c] sm:$0xf]
        %v1292 = vld [vmem:[%s1283 + $0x20] sm:$0xf]
        %v1293 = vld [vmem:[%s1283 + $0x24] sm:$0xf]
        %v1294 = vld [vmem:[%s1283 + $0x28] sm:$0xf]
        %v1295 = vld [vmem:[%s1283 + $0x2c] sm:$0xf]
        %v1296 = vld [vmem:[%s1283 + $0x30] sm:$0xf]
        %v1297 = vld [vmem:[%s1283 + $0x34] sm:$0xf]
        %v1298 = vld [vmem:[%s1283 + $0x38] sm:$0xf]
        %v1299 = vld [vmem:[%s1283 + $0x3c] sm:$0xf]
        %v1316 = vunpack.c.l.b16 %v1284
        %v1317 = vunpack.c.l.b16 %v1285
        %v1318 = vunpack.c.l.b16 %v1286
        %v1319 = vunpack.c.l.b16 %v1287
        %v1320 = vunpack.c.l.b16 %v1288
        %v1321 = vunpack.c.l.b16 %v1289
        %v1322 = vunpack.c.l.b16 %v1290
        %v1323 = vunpack.c.l.b16 %v1291
        %v1324 = vunpack.c.l.b16 %v1292
        %v1325 = vunpack.c.l.b16 %v1293
        %v1326 = vunpack.c.l.b16 %v1294
        %v1327 = vunpack.c.l.b16 %v1295
        %v1328 = vunpack.c.l.b16 %v1296
        %v1329 = vunpack.c.l.b16 %v1297
        %v1330 = vunpack.c.l.b16 %v1298
        %v1331 = vunpack.c.l.b16 %v1299
        %v1332 = vpack.c.b16 %v1317, %v1316
        %v1333 = vpack.c.b16 %v1319, %v1318
        %v1334 = vpack.c.b16 %v1321, %v1320
        %v1335 = vpack.c.b16 %v1323, %v1322
        %v1336 = vpack.c.b16 %v1325, %v1324
        %v1337 = vpack.c.b16 %v1327, %v1326
        %v1338 = vpack.c.b16 %v1329, %v1328
        %v1339 = vpack.c.b16 %v1331, %v1330
        %1348 = vmatprep.subr.bf16.mxu0 0
        %1349 = vmatpush1.bf16.msra.mxu0 %v1332
        %1350 = vmatprep.subr.bf16.mxu0 0
        %1351 = vmatpush1.bf16.msra.mxu0 %v1333
        %1352 = vmatprep.subr.bf16.mxu0 0
        %1353 = vmatpush1.bf16.msra.mxu0 %v1334
        %1354 = vmatprep.subr.bf16.mxu0 0
        %1355 = vmatpush1.bf16.msra.mxu0 %v1335
        %1356 = vmatprep.subr.bf16.mxu0 0
        %1357 = vmatpush1.bf16.msra.mxu0 %v1336
        %1358 = vmatprep.subr.bf16.mxu0 0
        %1359 = vmatpush1.bf16.msra.mxu0 %v1337
        %1360 = vmatprep.subr.bf16.mxu0 0
        %1361 = vmatpush1.bf16.msra.mxu0 %v1338
        %1362 = vmatprep.subr.bf16.mxu0 0
        %1363 = vmatpush1.bf16.msra.mxu0 %v1339
        %1364 = vmatprep.subr.bf16.mxu0 0
        %1365 = vmatpush1.bf16.msra.mxu0 0
        %1366 = vmatprep.subr.bf16.mxu0 0
        %1367 = vmatpush1.bf16.msra.mxu0 0
        %1368 = vmatprep.subr.bf16.mxu0 0
        %1369 = vmatpush1.bf16.msra.mxu0 0
        %1370 = vmatprep.subr.bf16.mxu0 0
        %1371 = vmatpush1.bf16.msra.mxu0 0
        %1372 = vmatprep.subr.bf16.mxu0 0
        %1373 = vmatpush1.bf16.msra.mxu0 0
        %1374 = vmatprep.subr.bf16.mxu0 0
        %1375 = vmatpush1.bf16.msra.mxu0 0
        %1376 = vmatprep.subr.bf16.mxu0 0
        %1377 = vmatpush1.bf16.msra.mxu0 0
        %1378 = vmatprep.subr.bf16.mxu0 0
        %1379 = vmatpush1.bf16.msra.mxu0 0
        %1380 = vmatprep.mubr.bf16.mxu0 0
        %1381 = vmatmul.mubr.bf16.gmra.mrb[0].mxu0 %v634
        %v1382 = vpop.f32.mrb[0].mxu0
        %v1383 = vadd.f32 0.0, %v1382
        %v1384 = vpop.f32.mrb[0].mxu0
        %v1385 = vpop.f32.mrb[0].mxu0
        %v1386 = vadd.f32 0.0, %v1385
        %v1387 = vpop.f32.mrb[0].mxu0
        %1388 = vmatprep.mubr.bf16.mxu0 0
        %1389 = vmatmul.mubr.bf16.gmra.mrb[0].mxu0 %v635
        %v1390 = vpop.f32.mrb[0].mxu0
        %v1391 = vadd.f32 0.0, %v1390
        %v1392 = vpop.f32.mrb[0].mxu0
        %v1393 = vpop.f32.mrb[0].mxu0
        %v1394 = vadd.f32 0.0, %v1393
        %v1395 = vpop.f32.mrb[0].mxu0
        %1396 = vmatprep.mubr.bf16.mxu0 0
        %1397 = vmatmul.mubr.bf16.gmra.mrb[0].mxu0 %v636
        %v1398 = vpop.f32.mrb[0].mxu0
        %v1399 = vadd.f32 0.0, %v1398
        %v1400 = vpop.f32.mrb[0].mxu0
        %v1401 = vpop.f32.mrb[0].mxu0
        %v1402 = vadd.f32 0.0, %v1401
        %v1403 = vpop.f32.mrb[0].mxu0
        %1404 = vmatprep.mubr.bf16.mxu0 0
        %1405 = vmatmul.mubr.bf16.gmra.mrb[0].mxu0 %v637
        %v1406 = vpop.f32.mrb[0].mxu0
        %v1407 = vadd.f32 0.0, %v1406
        %v1408 = vpop.f32.mrb[0].mxu0
        %v1409 = vpop.f32.mrb[0].mxu0
        %v1410 = vadd.f32 0.0, %v1409
        %v1411 = vpop.f32.mrb[0].mxu0
        %1412 = vmatprep.mubr.bf16.mxu0 0
        %1413 = vmatmul.mubr.bf16.gmra.mrb[0].mxu0 %v638
        %v1414 = vpop.f32.mrb[0].mxu0
        %v1415 = vadd.f32 0.0, %v1414
        %v1416 = vpop.f32.mrb[0].mxu0
        %v1417 = vpop.f32.mrb[0].mxu0
        %v1418 = vadd.f32 0.0, %v1417
        %v1419 = vpop.f32.mrb[0].mxu0
        %1420 = vmatprep.mubr.bf16.mxu0 0
        %1421 = vmatmul.mubr.bf16.gmra.mrb[0].mxu0 %v639
        %v1422 = vpop.f32.mrb[0].mxu0
        %v1423 = vadd.f32 0.0, %v1422
        %v1424 = vpop.f32.mrb[0].mxu0
        %v1425 = vpop.f32.mrb[0].mxu0
        %v1426 = vadd.f32 0.0, %v1425
        %v1427 = vpop.f32.mrb[0].mxu0
        %1428 = vmatprep.mubr.bf16.mxu0 0
        %1429 = vmatmul.mubr.bf16.gmra.mrb[0].mxu0 %v640
        %v1430 = vpop.f32.mrb[0].mxu0
        %v1431 = vadd.f32 0.0, %v1430
        %v1432 = vpop.f32.mrb[0].mxu0
        %v1433 = vpop.f32.mrb[0].mxu0
        %v1434 = vadd.f32 0.0, %v1433
        %v1435 = vpop.f32.mrb[0].mxu0
        %1436 = vmatprep.mubr.bf16.mxu0 0
        %1437 = vmatmul.mubr.bf16.gmra.mrb[0].mxu0 %v641
        %v1438 = vpop.f32.mrb[0].mxu0
        %v1439 = vadd.f32 0.0, %v1438
        %v1440 = vpop.f32.mrb[0].mxu0
        %v1441 = vpop.f32.mrb[0].mxu0
        %v1442 = vadd.f32 0.0, %v1441
        %v1443 = vpop.f32.mrb[0].mxu0
        %1444 = vdwg.mxu0
        %v1445 = vadd.f32 %v1267, %v1383
        %v1446 = vadd.f32 %v1268, %v1386
        %v1447 = vadd.f32 %v1269, %v1391
        %v1448 = vadd.f32 %v1270, %v1394
        %v1449 = vadd.f32 %v1271, %v1399
        %v1450 = vadd.f32 %v1272, %v1402
        %v1451 = vadd.f32 %v1273, %v1407
        %v1452 = vadd.f32 %v1274, %v1410
        %v1453 = vadd.f32 %v1275, %v1415
        %v1454 = vadd.f32 %v1276, %v1418
        %v1455 = vadd.f32 %v1277, %v1423
        %v1456 = vadd.f32 %v1278, %v1426
        %v1457 = vadd.f32 %v1279, %v1431
        %v1458 = vadd.f32 %v1280, %v1434
        %v1459 = vadd.f32 %v1281, %v1439
        %v1460 = vadd.f32 %v1282, %v1442
        %s1461 = scalar_lea.vmem [#allocation5], 256
        %v1462 = vld [vmem:[%s1461] sm:$0xf]
        %v1463 = vld [vmem:[%s1461 + $0x4] sm:$0xf]
        %v1464 = vld [vmem:[%s1461 + $0x8] sm:$0xf]
        %v1465 = vld [vmem:[%s1461 + $0xc] sm:$0xf]
        %v1466 = vld [vmem:[%s1461 + $0x10] sm:$0xf]
        %v1467 = vld [vmem:[%s1461 + $0x14] sm:$0xf]
        %v1468 = vld [vmem:[%s1461 + $0x18] sm:$0xf]
        %v1469 = vld [vmem:[%s1461 + $0x1c] sm:$0xf]
        %v1470 = vld [vmem:[%s1461 + $0x20] sm:$0xf]
        %v1471 = vld [vmem:[%s1461 + $0x24] sm:$0xf]
        %v1472 = vld [vmem:[%s1461 + $0x28] sm:$0xf]
        %v1473 = vld [vmem:[%s1461 + $0x2c] sm:$0xf]
        %v1474 = vld [vmem:[%s1461 + $0x30] sm:$0xf]
        %v1475 = vld [vmem:[%s1461 + $0x34] sm:$0xf]
        %v1476 = vld [vmem:[%s1461 + $0x38] sm:$0xf]
        %v1477 = vld [vmem:[%s1461 + $0x3c] sm:$0xf]
        %v1480 = vunpack.c.l.b16 %v267
        %v1481 = vunpack.c.l.b16 %v268
        %v1482 = vpack.c.b16 %v1481, %v1480
        %v1500 = vunpack.c.l.b16 %v1462
        %v1501 = vunpack.c.l.b16 %v1463
        %v1502 = vunpack.c.l.b16 %v1464
        %v1503 = vunpack.c.l.b16 %v1465
        %v1504 = vunpack.c.l.b16 %v1466
        %v1505 = vunpack.c.l.b16 %v1467
        %v1506 = vunpack.c.l.b16 %v1468
        %v1507 = vunpack.c.l.b16 %v1469
        %v1508 = vunpack.c.l.b16 %v1470
        %v1509 = vunpack.c.l.b16 %v1471
        %v1510 = vunpack.c.l.b16 %v1472
        %v1511 = vunpack.c.l.b16 %v1473
        %v1512 = vunpack.c.l.b16 %v1474
        %v1513 = vunpack.c.l.b16 %v1475
        %v1514 = vunpack.c.l.b16 %v1476
        %v1515 = vunpack.c.l.b16 %v1477
        %v1516 = vpack.c.b16 %v1501, %v1500
        %v1517 = vpack.c.b16 %v1503, %v1502
        %v1518 = vpack.c.b16 %v1505, %v1504
        %v1519 = vpack.c.b16 %v1507, %v1506
        %v1520 = vpack.c.b16 %v1509, %v1508
        %v1521 = vpack.c.b16 %v1511, %v1510
        %v1522 = vpack.c.b16 %v1513, %v1512
        %v1523 = vpack.c.b16 %v1515, %v1514
        %1532 = vmatprep.subr.bf16.mxu0 0
        %1533 = vmatpush1.bf16.msra.mxu0 %v1516
        %1534 = vmatprep.subr.bf16.mxu0 0
        %1535 = vmatpush1.bf16.msra.mxu0 %v1517
        %1536 = vmatprep.subr.bf16.mxu0 0
        %1537 = vmatpush1.bf16.msra.mxu0 %v1518
        %1538 = vmatprep.subr.bf16.mxu0 0
        %1539 = vmatpush1.bf16.msra.mxu0 %v1519
        %1540 = vmatprep.subr.bf16.mxu0 0
        %1541 = vmatpush1.bf16.msra.mxu0 %v1520
        %1542 = vmatprep.subr.bf16.mxu0 0
        %1543 = vmatpush1.bf16.msra.mxu0 %v1521
        %1544 = vmatprep.subr.bf16.mxu0 0
        %1545 = vmatpush1.bf16.msra.mxu0 %v1522
        %1546 = vmatprep.subr.bf16.mxu0 0
        %1547 = vmatpush1.bf16.msra.mxu0 %v1523
        %1548 = vmatprep.subr.bf16.mxu0 0
        %1549 = vmatpush1.bf16.msra.mxu0 0
        %1550 = vmatprep.subr.bf16.mxu0 0
        %1551 = vmatpush1.bf16.msra.mxu0 0
        %1552 = vmatprep.subr.bf16.mxu0 0
        %1553 = vmatpush1.bf16.msra.mxu0 0
        %1554 = vmatprep.subr.bf16.mxu0 0
        %1555 = vmatpush1.bf16.msra.mxu0 0
        %1556 = vmatprep.subr.bf16.mxu0 0
        %1557 = vmatpush1.bf16.msra.mxu0 0
        %1558 = vmatprep.subr.bf16.mxu0 0
        %1559 = vmatpush1.bf16.msra.mxu0 0
        %1560 = vmatprep.subr.bf16.mxu0 0
        %1561 = vmatpush1.bf16.msra.mxu0 0
        %1562 = vmatprep.subr.bf16.mxu0 0
        %1563 = vmatpush1.bf16.msra.mxu0 0
        %1564 = vmatprep.mubr.bf16.mxu0 0
        %1565 = vmatmul.mubr.bf16.gmra.mrb[0].mxu0 %v800
        %v1566 = vpop.f32.mrb[0].mxu0
        %v1567 = vadd.f32 0.0, %v1566
        %v1568 = vpop.f32.mrb[0].mxu0
        %v1569 = vpop.f32.mrb[0].mxu0
        %v1570 = vadd.f32 0.0, %v1569
        %v1571 = vpop.f32.mrb[0].mxu0
        %1572 = vmatprep.mubr.bf16.mxu0 0
        %1573 = vmatmul.mubr.bf16.gmra.mrb[0].mxu0 %v801
        %v1574 = vpop.f32.mrb[0].mxu0
        %v1575 = vadd.f32 0.0, %v1574
        %v1576 = vpop.f32.mrb[0].mxu0
        %v1577 = vpop.f32.mrb[0].mxu0
        %v1578 = vadd.f32 0.0, %v1577
        %v1579 = vpop.f32.mrb[0].mxu0
        %1580 = vmatprep.mubr.bf16.mxu0 0
        %1581 = vmatmul.mubr.bf16.gmra.mrb[0].mxu0 %v802
        %v1582 = vpop.f32.mrb[0].mxu0
        %v1583 = vadd.f32 0.0, %v1582
        %v1584 = vpop.f32.mrb[0].mxu0
        %v1585 = vpop.f32.mrb[0].mxu0
        %v1586 = vadd.f32 0.0, %v1585
        %v1587 = vpop.f32.mrb[0].mxu0
        %1588 = vmatprep.mubr.bf16.mxu0 0
        %1589 = vmatmul.mubr.bf16.gmra.mrb[0].mxu0 %v803
        %v1590 = vpop.f32.mrb[0].mxu0
        %v1591 = vadd.f32 0.0, %v1590
        %v1592 = vpop.f32.mrb[0].mxu0
        %v1593 = vpop.f32.mrb[0].mxu0
        %v1594 = vadd.f32 0.0, %v1593
        %v1595 = vpop.f32.mrb[0].mxu0
        %1596 = vmatprep.mubr.bf16.mxu0 0
        %1597 = vmatmul.mubr.bf16.gmra.mrb[0].mxu0 %v804
        %v1598 = vpop.f32.mrb[0].mxu0
        %v1599 = vadd.f32 0.0, %v1598
        %v1600 = vpop.f32.mrb[0].mxu0
        %v1601 = vpop.f32.mrb[0].mxu0
        %v1602 = vadd.f32 0.0, %v1601
        %v1603 = vpop.f32.mrb[0].mxu0
        %1604 = vmatprep.mubr.bf16.mxu0 0
        %1605 = vmatmul.mubr.bf16.gmra.mrb[0].mxu0 %v805
        %v1606 = vpop.f32.mrb[0].mxu0
        %v1607 = vadd.f32 0.0, %v1606
        %v1608 = vpop.f32.mrb[0].mxu0
        %v1609 = vpop.f32.mrb[0].mxu0
        %v1610 = vadd.f32 0.0, %v1609
        %v1611 = vpop.f32.mrb[0].mxu0
        %1612 = vmatprep.mubr.bf16.mxu0 0
        %1613 = vmatmul.mubr.bf16.gmra.mrb[0].mxu0 %v806
        %v1614 = vpop.f32.mrb[0].mxu0
        %v1615 = vadd.f32 0.0, %v1614
        %v1616 = vpop.f32.mrb[0].mxu0
        %v1617 = vpop.f32.mrb[0].mxu0
        %v1618 = vadd.f32 0.0, %v1617
        %v1619 = vpop.f32.mrb[0].mxu0
        %1620 = vmatprep.mubr.bf16.mxu0 0
        %1621 = vmatmul.mubr.bf16.gmra.mrb[0].mxu0 %v1482
        %v1622 = vpop.f32.mrb[0].mxu0
        %v1623 = vadd.f32 0.0, %v1622
        %v1624 = vpop.f32.mrb[0].mxu0
        %v1625 = vpop.f32.mrb[0].mxu0
        %v1626 = vadd.f32 0.0, %v1625
        %v1627 = vpop.f32.mrb[0].mxu0
        %1628 = vdwg.mxu0
        %v1629 = vadd.f32 %v1445, %v1567
        %v1630 = vadd.f32 %v1446, %v1570
        %v1631 = vadd.f32 %v1447, %v1575
        %v1632 = vadd.f32 %v1448, %v1578
        %v1633 = vadd.f32 %v1449, %v1583
        %v1634 = vadd.f32 %v1450, %v1586
        %v1635 = vadd.f32 %v1451, %v1591
        %v1636 = vadd.f32 %v1452, %v1594
        %v1637 = vadd.f32 %v1453, %v1599
        %v1638 = vadd.f32 %v1454, %v1602
        %v1639 = vadd.f32 %v1455, %v1607
        %v1640 = vadd.f32 %v1456, %v1610
        %v1641 = vadd.f32 %v1457, %v1615
        %v1642 = vadd.f32 %v1458, %v1618
        %v1643 = vadd.f32 %v1459, %v1623
        %v1644 = vadd.f32 %v1460, %v1626
        %s1645 = scalar_lea.vmem [#allocation5], 320
        %v1646 = vld [vmem:[%s1645] sm:$0xf]
        %v1647 = vld [vmem:[%s1645 + $0x4] sm:$0xf]
        %v1648 = vld [vmem:[%s1645 + $0x8] sm:$0xf]
        %v1649 = vld [vmem:[%s1645 + $0xc] sm:$0xf]
        %v1650 = vld [vmem:[%s1645 + $0x10] sm:$0xf]
        %v1651 = vld [vmem:[%s1645 + $0x14] sm:$0xf]
        %v1652 = vld [vmem:[%s1645 + $0x18] sm:$0xf]
        %v1653 = vld [vmem:[%s1645 + $0x1c] sm:$0xf]
        %v1654 = vld [vmem:[%s1645 + $0x20] sm:$0xf]
        %v1655 = vld [vmem:[%s1645 + $0x24] sm:$0xf]
        %v1656 = vld [vmem:[%s1645 + $0x28] sm:$0xf]
        %v1657 = vld [vmem:[%s1645 + $0x2c] sm:$0xf]
        %v1658 = vld [vmem:[%s1645 + $0x30] sm:$0xf]
        %v1659 = vld [vmem:[%s1645 + $0x34] sm:$0xf]
        %v1660 = vld [vmem:[%s1645 + $0x38] sm:$0xf]
        %v1661 = vld [vmem:[%s1645 + $0x3c] sm:$0xf]
        %v1678 = vunpack.c.l.b16 %v1646
        %v1679 = vunpack.c.l.b16 %v1647
        %v1680 = vunpack.c.l.b16 %v1648
        %v1681 = vunpack.c.l.b16 %v1649
        %v1682 = vunpack.c.l.b16 %v1650
        %v1683 = vunpack.c.l.b16 %v1651
        %v1684 = vunpack.c.l.b16 %v1652
        %v1685 = vunpack.c.l.b16 %v1653
        %v1686 = vunpack.c.l.b16 %v1654
        %v1687 = vunpack.c.l.b16 %v1655
        %v1688 = vunpack.c.l.b16 %v1656
        %v1689 = vunpack.c.l.b16 %v1657
        %v1690 = vunpack.c.l.b16 %v1658
        %v1691 = vunpack.c.l.b16 %v1659
        %v1692 = vunpack.c.l.b16 %v1660
        %v1693 = vunpack.c.l.b16 %v1661
        %v1694 = vpack.c.b16 %v1679, %v1678
        %v1695 = vpack.c.b16 %v1681, %v1680
        %v1696 = vpack.c.b16 %v1683, %v1682
        %v1697 = vpack.c.b16 %v1685, %v1684
        %v1698 = vpack.c.b16 %v1687, %v1686
        %v1699 = vpack.c.b16 %v1689, %v1688
        %v1700 = vpack.c.b16 %v1691, %v1690
        %v1701 = vpack.c.b16 %v1693, %v1692
        %1710 = vmatprep.subr.bf16.mxu0 0
        %1711 = vmatpush1.bf16.msra.mxu0 %v1694
        %1712 = vmatprep.subr.bf16.mxu0 0
        %1713 = vmatpush1.bf16.msra.mxu0 %v1695
        %1714 = vmatprep.subr.bf16.mxu0 0
        %1715 = vmatpush1.bf16.msra.mxu0 %v1696
        %1716 = vmatprep.subr.bf16.mxu0 0
        %1717 = vmatpush1.bf16.msra.mxu0 %v1697
        %1718 = vmatprep.subr.bf16.mxu0 0
        %1719 = vmatpush1.bf16.msra.mxu0 %v1698
        %1720 = vmatprep.subr.bf16.mxu0 0
        %1721 = vmatpush1.bf16.msra.mxu0 %v1699
        %1722 = vmatprep.subr.bf16.mxu0 0
        %1723 = vmatpush1.bf16.msra.mxu0 %v1700
        %1724 = vmatprep.subr.bf16.mxu0 0
        %1725 = vmatpush1.bf16.msra.mxu0 %v1701
        %1726 = vmatprep.subr.bf16.mxu0 0
        %1727 = vmatpush1.bf16.msra.mxu0 0
        %1728 = vmatprep.subr.bf16.mxu0 0
        %1729 = vmatpush1.bf16.msra.mxu0 0
        %1730 = vmatprep.subr.bf16.mxu0 0
        %1731 = vmatpush1.bf16.msra.mxu0 0
        %1732 = vmatprep.subr.bf16.mxu0 0
        %1733 = vmatpush1.bf16.msra.mxu0 0
        %1734 = vmatprep.subr.bf16.mxu0 0
        %1735 = vmatpush1.bf16.msra.mxu0 0
        %1736 = vmatprep.subr.bf16.mxu0 0
        %1737 = vmatpush1.bf16.msra.mxu0 0
        %1738 = vmatprep.subr.bf16.mxu0 0
        %1739 = vmatpush1.bf16.msra.mxu0 0
        %1740 = vmatprep.subr.bf16.mxu0 0
        %1741 = vmatpush1.bf16.msra.mxu0 0
        %1742 = vmatprep.mubr.bf16.mxu0 0
        %1743 = vmatmul.mubr.bf16.gmra.mrb[0].mxu0 %v725
        %v1744 = vpop.f32.mrb[0].mxu0
        %v1745 = vadd.f32 0.0, %v1744
        %v1746 = vpop.f32.mrb[0].mxu0
        %v1747 = vpop.f32.mrb[0].mxu0
        %v1748 = vadd.f32 0.0, %v1747
        %v1749 = vpop.f32.mrb[0].mxu0
        %1750 = vmatprep.mubr.bf16.mxu0 0
        %1751 = vmatmul.mubr.bf16.gmra.mrb[0].mxu0 %v726
        %v1752 = vpop.f32.mrb[0].mxu0
        %v1753 = vadd.f32 0.0, %v1752
        %v1754 = vpop.f32.mrb[0].mxu0
        %v1755 = vpop.f32.mrb[0].mxu0
        %v1756 = vadd.f32 0.0, %v1755
        %v1757 = vpop.f32.mrb[0].mxu0
        %1758 = vmatprep.mubr.bf16.mxu0 0
        %1759 = vmatmul.mubr.bf16.gmra.mrb[0].mxu0 %v727
        %v1760 = vpop.f32.mrb[0].mxu0
        %v1761 = vadd.f32 0.0, %v1760
        %v1762 = vpop.f32.mrb[0].mxu0
        %v1763 = vpop.f32.mrb[0].mxu0
        %v1764 = vadd.f32 0.0, %v1763
        %v1765 = vpop.f32.mrb[0].mxu0
        %1766 = vmatprep.mubr.bf16.mxu0 0
        %1767 = vmatmul.mubr.bf16.gmra.mrb[0].mxu0 %v728
        %v1768 = vpop.f32.mrb[0].mxu0
        %v1769 = vadd.f32 0.0, %v1768
        %v1770 = vpop.f32.mrb[0].mxu0
        %v1771 = vpop.f32.mrb[0].mxu0
        %v1772 = vadd.f32 0.0, %v1771
        %v1773 = vpop.f32.mrb[0].mxu0
        %1774 = vmatprep.mubr.bf16.mxu0 0
        %1775 = vmatmul.mubr.bf16.gmra.mrb[0].mxu0 %v729
        %v1776 = vpop.f32.mrb[0].mxu0
        %v1777 = vadd.f32 0.0, %v1776
        %v1778 = vpop.f32.mrb[0].mxu0
        %v1779 = vpop.f32.mrb[0].mxu0
        %v1780 = vadd.f32 0.0, %v1779
        %v1781 = vpop.f32.mrb[0].mxu0
        %1782 = vmatprep.mubr.bf16.mxu0 0
        %1783 = vmatmul.mubr.bf16.gmra.mrb[0].mxu0 %v730
        %v1784 = vpop.f32.mrb[0].mxu0
        %v1785 = vadd.f32 0.0, %v1784
        %v1786 = vpop.f32.mrb[0].mxu0
        %v1787 = vpop.f32.mrb[0].mxu0
        %v1788 = vadd.f32 0.0, %v1787
        %v1789 = vpop.f32.mrb[0].mxu0
        %1790 = vmatprep.mubr.bf16.mxu0 0
        %1791 = vmatmul.mubr.bf16.gmra.mrb[0].mxu0 %v731
        %v1792 = vpop.f32.mrb[0].mxu0
        %v1793 = vadd.f32 0.0, %v1792
        %v1794 = vpop.f32.mrb[0].mxu0
        %v1795 = vpop.f32.mrb[0].mxu0
        %v1796 = vadd.f32 0.0, %v1795
        %v1797 = vpop.f32.mrb[0].mxu0
        %1798 = vmatprep.mubr.bf16.mxu0 0
        %1799 = vmatmul.mubr.bf16.gmra.mrb[0].mxu0 %v732
        %v1800 = vpop.f32.mrb[0].mxu0
        %v1801 = vadd.f32 0.0, %v1800
        %v1802 = vpop.f32.mrb[0].mxu0
        %v1803 = vpop.f32.mrb[0].mxu0
        %v1804 = vadd.f32 0.0, %v1803
        %v1805 = vpop.f32.mrb[0].mxu0
        %1806 = vdwg.mxu0
        %v1807 = vadd.f32 %v1629, %v1745
        %v1808 = vadd.f32 %v1630, %v1748
        %v1809 = vadd.f32 %v1631, %v1753
        %v1810 = vadd.f32 %v1632, %v1756
        %v1811 = vadd.f32 %v1633, %v1761
        %v1812 = vadd.f32 %v1634, %v1764
        %v1813 = vadd.f32 %v1635, %v1769
        %v1814 = vadd.f32 %v1636, %v1772
        %v1815 = vadd.f32 %v1637, %v1777
        %v1816 = vadd.f32 %v1638, %v1780
        %v1817 = vadd.f32 %v1639, %v1785
        %v1818 = vadd.f32 %v1640, %v1788
        %v1819 = vadd.f32 %v1641, %v1793
        %v1820 = vadd.f32 %v1642, %v1796
        %v1821 = vadd.f32 %v1643, %v1801
        %v1822 = vadd.f32 %v1644, %v1804
        %s1823 = scalar_lea.vmem [#allocation5], 384
        %v1824 = vld [vmem:[%s1823] sm:$0xf]
        %v1825 = vld [vmem:[%s1823 + $0x4] sm:$0xf]
        %v1826 = vld [vmem:[%s1823 + $0x8] sm:$0xf]
        %v1827 = vld [vmem:[%s1823 + $0xc] sm:$0xf]
        %v1828 = vld [vmem:[%s1823 + $0x10] sm:$0xf]
        %v1829 = vld [vmem:[%s1823 + $0x14] sm:$0xf]
        %v1830 = vld [vmem:[%s1823 + $0x18] sm:$0xf]
        %v1831 = vld [vmem:[%s1823 + $0x1c] sm:$0xf]
        %v1832 = vld [vmem:[%s1823 + $0x20] sm:$0xf]
        %v1833 = vld [vmem:[%s1823 + $0x24] sm:$0xf]
        %v1834 = vld [vmem:[%s1823 + $0x28] sm:$0xf]
        %v1835 = vld [vmem:[%s1823 + $0x2c] sm:$0xf]
        %v1836 = vld [vmem:[%s1823 + $0x30] sm:$0xf]
        %v1837 = vld [vmem:[%s1823 + $0x34] sm:$0xf]
        %v1838 = vld [vmem:[%s1823 + $0x38] sm:$0xf]
        %v1839 = vld [vmem:[%s1823 + $0x3c] sm:$0xf]
        %v1856 = vunpack.c.l.b16 %v1824
        %v1857 = vunpack.c.l.b16 %v1825
        %v1858 = vunpack.c.l.b16 %v1826
        %v1859 = vunpack.c.l.b16 %v1827
        %v1860 = vunpack.c.l.b16 %v1828
        %v1861 = vunpack.c.l.b16 %v1829
        %v1862 = vunpack.c.l.b16 %v1830
        %v1863 = vunpack.c.l.b16 %v1831
        %v1864 = vunpack.c.l.b16 %v1832
        %v1865 = vunpack.c.l.b16 %v1833
        %v1866 = vunpack.c.l.b16 %v1834
        %v1867 = vunpack.c.l.b16 %v1835
        %v1868 = vunpack.c.l.b16 %v1836
        %v1869 = vunpack.c.l.b16 %v1837
        %v1870 = vunpack.c.l.b16 %v1838
        %v1871 = vunpack.c.l.b16 %v1839
        %v1872 = vpack.c.b16 %v1857, %v1856
        %v1873 = vpack.c.b16 %v1859, %v1858
        %v1874 = vpack.c.b16 %v1861, %v1860
        %v1875 = vpack.c.b16 %v1863, %v1862
        %v1876 = vpack.c.b16 %v1865, %v1864
        %v1877 = vpack.c.b16 %v1867, %v1866
        %v1878 = vpack.c.b16 %v1869, %v1868
        %v1879 = vpack.c.b16 %v1871, %v1870
        %1888 = vmatprep.subr.bf16.mxu0 0
        %1889 = vmatpush1.bf16.msra.mxu0 %v1872
        %1890 = vmatprep.subr.bf16.mxu0 0
        %1891 = vmatpush1.bf16.msra.mxu0 %v1873
        %1892 = vmatprep.subr.bf16.mxu0 0
        %1893 = vmatpush1.bf16.msra.mxu0 %v1874
        %1894 = vmatprep.subr.bf16.mxu0 0
        %1895 = vmatpush1.bf16.msra.mxu0 %v1875
        %1896 = vmatprep.subr.bf16.mxu0 0
        %1897 = vmatpush1.bf16.msra.mxu0 %v1876
        %1898 = vmatprep.subr.bf16.mxu0 0
        %1899 = vmatpush1.bf16.msra.mxu0 %v1877
        %1900 = vmatprep.subr.bf16.mxu0 0
        %1901 = vmatpush1.bf16.msra.mxu0 %v1878
        %1902 = vmatprep.subr.bf16.mxu0 0
        %1903 = vmatpush1.bf16.msra.mxu0 %v1879
        %1904 = vmatprep.subr.bf16.mxu0 0
        %1905 = vmatpush1.bf16.msra.mxu0 0
        %1906 = vmatprep.subr.bf16.mxu0 0
        %1907 = vmatpush1.bf16.msra.mxu0 0
        %1908 = vmatprep.subr.bf16.mxu0 0
        %1909 = vmatpush1.bf16.msra.mxu0 0
        %1910 = vmatprep.subr.bf16.mxu0 0
        %1911 = vmatpush1.bf16.msra.mxu0 0
        %1912 = vmatprep.subr.bf16.mxu0 0
        %1913 = vmatpush1.bf16.msra.mxu0 0
        %1914 = vmatprep.subr.bf16.mxu0 0
        %1915 = vmatpush1.bf16.msra.mxu0 0
        %1916 = vmatprep.subr.bf16.mxu0 0
        %1917 = vmatpush1.bf16.msra.mxu0 0
        %1918 = vmatprep.subr.bf16.mxu0 0
        %1919 = vmatpush1.bf16.msra.mxu0 0
        %1920 = vmatprep.mubr.bf16.mxu0 0
        %1921 = vmatmul.mubr.bf16.gmra.mrb[0].mxu0 %v635
        %v1922 = vpop.f32.mrb[0].mxu0
        %v1923 = vadd.f32 0.0, %v1922
        %v1924 = vpop.f32.mrb[0].mxu0
        %v1925 = vpop.f32.mrb[0].mxu0
        %v1926 = vadd.f32 0.0, %v1925
        %v1927 = vpop.f32.mrb[0].mxu0
        %1928 = vmatprep.mubr.bf16.mxu0 0
        %1929 = vmatmul.mubr.bf16.gmra.mrb[0].mxu0 %v636
        %v1930 = vpop.f32.mrb[0].mxu0
        %v1931 = vadd.f32 0.0, %v1930
        %v1932 = vpop.f32.mrb[0].mxu0
        %v1933 = vpop.f32.mrb[0].mxu0
        %v1934 = vadd.f32 0.0, %v1933
        %v1935 = vpop.f32.mrb[0].mxu0
        %1936 = vmatprep.mubr.bf16.mxu0 0
        %1937 = vmatmul.mubr.bf16.gmra.mrb[0].mxu0 %v637
        %v1938 = vpop.f32.mrb[0].mxu0
        %v1939 = vadd.f32 0.0, %v1938
        %v1940 = vpop.f32.mrb[0].mxu0
        %v1941 = vpop.f32.mrb[0].mxu0
        %v1942 = vadd.f32 0.0, %v1941
        %v1943 = vpop.f32.mrb[0].mxu0
        %1944 = vmatprep.mubr.bf16.mxu0 0
        %1945 = vmatmul.mubr.bf16.gmra.mrb[0].mxu0 %v638
        %v1946 = vpop.f32.mrb[0].mxu0
        %v1947 = vadd.f32 0.0, %v1946
        %v1948 = vpop.f32.mrb[0].mxu0
        %v1949 = vpop.f32.mrb[0].mxu0
        %v1950 = vadd.f32 0.0, %v1949
        %v1951 = vpop.f32.mrb[0].mxu0
        %1952 = vmatprep.mubr.bf16.mxu0 0
        %1953 = vmatmul.mubr.bf16.gmra.mrb[0].mxu0 %v639
        %v1954 = vpop.f32.mrb[0].mxu0
        %v1955 = vadd.f32 0.0, %v1954
        %v1956 = vpop.f32.mrb[0].mxu0
        %v1957 = vpop.f32.mrb[0].mxu0
        %v1958 = vadd.f32 0.0, %v1957
        %v1959 = vpop.f32.mrb[0].mxu0
        %1960 = vmatprep.mubr.bf16.mxu0 0
        %1961 = vmatmul.mubr.bf16.gmra.mrb[0].mxu0 %v640
        %v1962 = vpop.f32.mrb[0].mxu0
        %v1963 = vadd.f32 0.0, %v1962
        %v1964 = vpop.f32.mrb[0].mxu0
        %v1965 = vpop.f32.mrb[0].mxu0
        %v1966 = vadd.f32 0.0, %v1965
        %v1967 = vpop.f32.mrb[0].mxu0
        %1968 = vmatprep.mubr.bf16.mxu0 0
        %1969 = vmatmul.mubr.bf16.gmra.mrb[0].mxu0 %v641
        %v1970 = vpop.f32.mrb[0].mxu0
        %v1971 = vadd.f32 0.0, %v1970
        %v1972 = vpop.f32.mrb[0].mxu0
        %v1973 = vpop.f32.mrb[0].mxu0
        %v1974 = vadd.f32 0.0, %v1973
        %v1975 = vpop.f32.mrb[0].mxu0
        %1976 = vmatprep.mubr.bf16.mxu0 0
        %1977 = vmatmul.mubr.bf16.gmra.mrb[0].mxu0 %v642
        %v1978 = vpop.f32.mrb[0].mxu0
        %v1979 = vadd.f32 0.0, %v1978
        %v1980 = vpop.f32.mrb[0].mxu0
        %v1981 = vpop.f32.mrb[0].mxu0
        %v1982 = vadd.f32 0.0, %v1981
        %v1983 = vpop.f32.mrb[0].mxu0
        %1984 = vdwg.mxu0
        %v1985 = vadd.f32 %v1807, %v1923
        %v1986 = vadd.f32 %v1808, %v1926
        %v1987 = vadd.f32 %v1809, %v1931
        %v1988 = vadd.f32 %v1810, %v1934
        %v1989 = vadd.f32 %v1811, %v1939
        %v1990 = vadd.f32 %v1812, %v1942
        %v1991 = vadd.f32 %v1813, %v1947
        %v1992 = vadd.f32 %v1814, %v1950
        %v1993 = vadd.f32 %v1815, %v1955
        %v1994 = vadd.f32 %v1816, %v1958
        %v1995 = vadd.f32 %v1817, %v1963
        %v1996 = vadd.f32 %v1818, %v1966
        %v1997 = vadd.f32 %v1819, %v1971
        %v1998 = vadd.f32 %v1820, %v1974
        %v1999 = vadd.f32 %v1821, %v1979
        %v2000 = vadd.f32 %v1822, %v1982
        %s2001 = scalar_lea.vmem [#allocation5], 448
        %v2002 = vld [vmem:[%s2001] sm:$0xf]
        %v2003 = vld [vmem:[%s2001 + $0x4] sm:$0xf]
        %v2004 = vld [vmem:[%s2001 + $0x8] sm:$0xf]
        %v2005 = vld [vmem:[%s2001 + $0xc] sm:$0xf]
        %v2006 = vld [vmem:[%s2001 + $0x10] sm:$0xf]
        %v2007 = vld [vmem:[%s2001 + $0x14] sm:$0xf]
        %v2008 = vld [vmem:[%s2001 + $0x18] sm:$0xf]
        %v2009 = vld [vmem:[%s2001 + $0x1c] sm:$0xf]
        %v2010 = vld [vmem:[%s2001 + $0x20] sm:$0xf]
        %v2011 = vld [vmem:[%s2001 + $0x24] sm:$0xf]
        %v2012 = vld [vmem:[%s2001 + $0x28] sm:$0xf]
        %v2013 = vld [vmem:[%s2001 + $0x2c] sm:$0xf]
        %v2014 = vld [vmem:[%s2001 + $0x30] sm:$0xf]
        %v2015 = vld [vmem:[%s2001 + $0x34] sm:$0xf]
        %v2016 = vld [vmem:[%s2001 + $0x38] sm:$0xf]
        %v2017 = vld [vmem:[%s2001 + $0x3c] sm:$0xf]
        %v2020 = vunpack.c.l.b16 %v269
        %v2021 = vunpack.c.l.b16 %v270
        %v2022 = vpack.c.b16 %v2021, %v2020
        %v2040 = vunpack.c.l.b16 %v2002
        %v2041 = vunpack.c.l.b16 %v2003
        %v2042 = vunpack.c.l.b16 %v2004
        %v2043 = vunpack.c.l.b16 %v2005
        %v2044 = vunpack.c.l.b16 %v2006
        %v2045 = vunpack.c.l.b16 %v2007
        %v2046 = vunpack.c.l.b16 %v2008
        %v2047 = vunpack.c.l.b16 %v2009
        %v2048 = vunpack.c.l.b16 %v2010
        %v2049 = vunpack.c.l.b16 %v2011
        %v2050 = vunpack.c.l.b16 %v2012
        %v2051 = vunpack.c.l.b16 %v2013
        %v2052 = vunpack.c.l.b16 %v2014
        %v2053 = vunpack.c.l.b16 %v2015
        %v2054 = vunpack.c.l.b16 %v2016
        %v2055 = vunpack.c.l.b16 %v2017
        %v2056 = vpack.c.b16 %v2041, %v2040
        %v2057 = vpack.c.b16 %v2043, %v2042
        %v2058 = vpack.c.b16 %v2045, %v2044
        %v2059 = vpack.c.b16 %v2047, %v2046
        %v2060 = vpack.c.b16 %v2049, %v2048
        %v2061 = vpack.c.b16 %v2051, %v2050
        %v2062 = vpack.c.b16 %v2053, %v2052
        %v2063 = vpack.c.b16 %v2055, %v2054
        %2072 = vmatprep.subr.bf16.mxu0 0
        %2073 = vmatpush1.bf16.msra.mxu0 %v2056
        %2074 = vmatprep.subr.bf16.mxu0 0
        %2075 = vmatpush1.bf16.msra.mxu0 %v2057
        %2076 = vmatprep.subr.bf16.mxu0 0
        %2077 = vmatpush1.bf16.msra.mxu0 %v2058
        %2078 = vmatprep.subr.bf16.mxu0 0
        %2079 = vmatpush1.bf16.msra.mxu0 %v2059
        %2080 = vmatprep.subr.bf16.mxu0 0
        %2081 = vmatpush1.bf16.msra.mxu0 %v2060
        %2082 = vmatprep.subr.bf16.mxu0 0
        %2083 = vmatpush1.bf16.msra.mxu0 %v2061
        %2084 = vmatprep.subr.bf16.mxu0 0
        %2085 = vmatpush1.bf16.msra.mxu0 %v2062
        %2086 = vmatprep.subr.bf16.mxu0 0
        %2087 = vmatpush1.bf16.msra.mxu0 %v2063
        %2088 = vmatprep.subr.bf16.mxu0 0
        %2089 = vmatpush1.bf16.msra.mxu0 0
        %2090 = vmatprep.subr.bf16.mxu0 0
        %2091 = vmatpush1.bf16.msra.mxu0 0
        %2092 = vmatprep.subr.bf16.mxu0 0
        %2093 = vmatpush1.bf16.msra.mxu0 0
        %2094 = vmatprep.subr.bf16.mxu0 0
        %2095 = vmatpush1.bf16.msra.mxu0 0
        %2096 = vmatprep.subr.bf16.mxu0 0
        %2097 = vmatpush1.bf16.msra.mxu0 0
        %2098 = vmatprep.subr.bf16.mxu0 0
        %2099 = vmatpush1.bf16.msra.mxu0 0
        %2100 = vmatprep.subr.bf16.mxu0 0
        %2101 = vmatpush1.bf16.msra.mxu0 0
        %2102 = vmatprep.subr.bf16.mxu0 0
        %2103 = vmatpush1.bf16.msra.mxu0 0
        %2104 = vmatprep.mubr.bf16.mxu0 0
        %2105 = vmatmul.mubr.bf16.gmra.mrb[0].mxu0 %v801
        %v2106 = vpop.f32.mrb[0].mxu0
        %v2107 = vadd.f32 0.0, %v2106
        %v2108 = vpop.f32.mrb[0].mxu0
        %v2109 = vpop.f32.mrb[0].mxu0
        %v2110 = vadd.f32 0.0, %v2109
        %v2111 = vpop.f32.mrb[0].mxu0
        %2112 = vmatprep.mubr.bf16.mxu0 0
        %2113 = vmatmul.mubr.bf16.gmra.mrb[0].mxu0 %v802
        %v2114 = vpop.f32.mrb[0].mxu0
        %v2115 = vadd.f32 0.0, %v2114
        %v2116 = vpop.f32.mrb[0].mxu0
        %v2117 = vpop.f32.mrb[0].mxu0
        %v2118 = vadd.f32 0.0, %v2117
        %v2119 = vpop.f32.mrb[0].mxu0
        %2120 = vmatprep.mubr.bf16.mxu0 0
        %2121 = vmatmul.mubr.bf16.gmra.mrb[0].mxu0 %v803
        %v2122 = vpop.f32.mrb[0].mxu0
        %v2123 = vadd.f32 0.0, %v2122
        %v2124 = vpop.f32.mrb[0].mxu0
        %v2125 = vpop.f32.mrb[0].mxu0
        %v2126 = vadd.f32 0.0, %v2125
        %v2127 = vpop.f32.mrb[0].mxu0
        %2128 = vmatprep.mubr.bf16.mxu0 0
        %2129 = vmatmul.mubr.bf16.gmra.mrb[0].mxu0 %v804
        %v2130 = vpop.f32.mrb[0].mxu0
        %v2131 = vadd.f32 0.0, %v2130
        %v2132 = vpop.f32.mrb[0].mxu0
        %v2133 = vpop.f32.mrb[0].mxu0
        %v2134 = vadd.f32 0.0, %v2133
        %v2135 = vpop.f32.mrb[0].mxu0
        %2136 = vmatprep.mubr.bf16.mxu0 0
        %2137 = vmatmul.mubr.bf16.gmra.mrb[0].mxu0 %v805
        %v2138 = vpop.f32.mrb[0].mxu0
        %v2139 = vadd.f32 0.0, %v2138
        %v2140 = vpop.f32.mrb[0].mxu0
        %v2141 = vpop.f32.mrb[0].mxu0
        %v2142 = vadd.f32 0.0, %v2141
        %v2143 = vpop.f32.mrb[0].mxu0
        %2144 = vmatprep.mubr.bf16.mxu0 0
        %2145 = vmatmul.mubr.bf16.gmra.mrb[0].mxu0 %v806
        %v2146 = vpop.f32.mrb[0].mxu0
        %v2147 = vadd.f32 0.0, %v2146
        %v2148 = vpop.f32.mrb[0].mxu0
        %v2149 = vpop.f32.mrb[0].mxu0
        %v2150 = vadd.f32 0.0, %v2149
        %v2151 = vpop.f32.mrb[0].mxu0
        %2152 = vmatprep.mubr.bf16.mxu0 0
        %2153 = vmatmul.mubr.bf16.gmra.mrb[0].mxu0 %v1482
        %v2154 = vpop.f32.mrb[0].mxu0
        %v2155 = vadd.f32 0.0, %v2154
        %v2156 = vpop.f32.mrb[0].mxu0
        %v2157 = vpop.f32.mrb[0].mxu0
        %v2158 = vadd.f32 0.0, %v2157
        %v2159 = vpop.f32.mrb[0].mxu0
        %2160 = vmatprep.mubr.bf16.mxu0 0
        %2161 = vmatmul.mubr.bf16.gmra.mrb[0].mxu0 %v2022
        %v2162 = vpop.f32.mrb[0].mxu0
        %v2163 = vadd.f32 0.0, %v2162
        %v2164 = vpop.f32.mrb[0].mxu0
        %v2165 = vpop.f32.mrb[0].mxu0
        %v2166 = vadd.f32 0.0, %v2165
        %v2167 = vpop.f32.mrb[0].mxu0
        %2168 = vdwg.mxu0
        %v2169 = vadd.f32 %v1985, %v2107
        %v2170 = vadd.f32 %v1986, %v2110
        %v2171 = vadd.f32 %v1987, %v2115
        %v2172 = vadd.f32 %v1988, %v2118
        %v2173 = vadd.f32 %v1989, %v2123
        %v2174 = vadd.f32 %v1990, %v2126
        %v2175 = vadd.f32 %v1991, %v2131
        %v2176 = vadd.f32 %v1992, %v2134
        %v2177 = vadd.f32 %v1993, %v2139
        %v2178 = vadd.f32 %v1994, %v2142
        %v2179 = vadd.f32 %v1995, %v2147
        %v2180 = vadd.f32 %v1996, %v2150
        %v2181 = vadd.f32 %v1997, %v2155
        %v2182 = vadd.f32 %v1998, %v2158
        %v2183 = vadd.f32 %v1999, %v2163
        %v2184 = vadd.f32 %v2000, %v2166
        %s2185 = scalar_lea.vmem [#allocation5], 512
        %v2186 = vld [vmem:[%s2185] sm:$0xf]
        %v2187 = vld [vmem:[%s2185 + $0x4] sm:$0xf]
        %v2188 = vld [vmem:[%s2185 + $0x8] sm:$0xf]
        %v2189 = vld [vmem:[%s2185 + $0xc] sm:$0xf]
        %v2190 = vld [vmem:[%s2185 + $0x10] sm:$0xf]
        %v2191 = vld [vmem:[%s2185 + $0x14] sm:$0xf]
        %v2192 = vld [vmem:[%s2185 + $0x18] sm:$0xf]
        %v2193 = vld [vmem:[%s2185 + $0x1c] sm:$0xf]
        %v2194 = vld [vmem:[%s2185 + $0x20] sm:$0xf]
        %v2195 = vld [vmem:[%s2185 + $0x24] sm:$0xf]
        %v2196 = vld [vmem:[%s2185 + $0x28] sm:$0xf]
        %v2197 = vld [vmem:[%s2185 + $0x2c] sm:$0xf]
        %v2198 = vld [vmem:[%s2185 + $0x30] sm:$0xf]
        %v2199 = vld [vmem:[%s2185 + $0x34] sm:$0xf]
        %v2200 = vld [vmem:[%s2185 + $0x38] sm:$0xf]
        %v2201 = vld [vmem:[%s2185 + $0x3c] sm:$0xf]
        %v2218 = vunpack.c.l.b16 %v2186
        %v2219 = vunpack.c.l.b16 %v2187
        %v2220 = vunpack.c.l.b16 %v2188
        %v2221 = vunpack.c.l.b16 %v2189
        %v2222 = vunpack.c.l.b16 %v2190
        %v2223 = vunpack.c.l.b16 %v2191
        %v2224 = vunpack.c.l.b16 %v2192
        %v2225 = vunpack.c.l.b16 %v2193
        %v2226 = vunpack.c.l.b16 %v2194
        %v2227 = vunpack.c.l.b16 %v2195
        %v2228 = vunpack.c.l.b16 %v2196
        %v2229 = vunpack.c.l.b16 %v2197
        %v2230 = vunpack.c.l.b16 %v2198
        %v2231 = vunpack.c.l.b16 %v2199
        %v2232 = vunpack.c.l.b16 %v2200
        %v2233 = vunpack.c.l.b16 %v2201
        %v2234 = vpack.c.b16 %v2219, %v2218
        %v2235 = vpack.c.b16 %v2221, %v2220
        %v2236 = vpack.c.b16 %v2223, %v2222
        %v2237 = vpack.c.b16 %v2225, %v2224
        %v2238 = vpack.c.b16 %v2227, %v2226
        %v2239 = vpack.c.b16 %v2229, %v2228
        %v2240 = vpack.c.b16 %v2231, %v2230
        %v2241 = vpack.c.b16 %v2233, %v2232
        %2250 = vmatprep.subr.bf16.mxu0 0
        %2251 = vmatpush1.bf16.msra.mxu0 %v2234
        %2252 = vmatprep.subr.bf16.mxu0 0
        %2253 = vmatpush1.bf16.msra.mxu0 %v2235
        %2254 = vmatprep.subr.bf16.mxu0 0
        %2255 = vmatpush1.bf16.msra.mxu0 %v2236
        %2256 = vmatprep.subr.bf16.mxu0 0
        %2257 = vmatpush1.bf16.msra.mxu0 %v2237
        %2258 = vmatprep.subr.bf16.mxu0 0
        %2259 = vmatpush1.bf16.msra.mxu0 %v2238
        %2260 = vmatprep.subr.bf16.mxu0 0
        %2261 = vmatpush1.bf16.msra.mxu0 %v2239
        %2262 = vmatprep.subr.bf16.mxu0 0
        %2263 = vmatpush1.bf16.msra.mxu0 %v2240
        %2264 = vmatprep.subr.bf16.mxu0 0
        %2265 = vmatpush1.bf16.msra.mxu0 %v2241
        %2266 = vmatprep.subr.bf16.mxu0 0
        %2267 = vmatpush1.bf16.msra.mxu0 0
        %2268 = vmatprep.subr.bf16.mxu0 0
        %2269 = vmatpush1.bf16.msra.mxu0 0
        %2270 = vmatprep.subr.bf16.mxu0 0
        %2271 = vmatpush1.bf16.msra.mxu0 0
        %2272 = vmatprep.subr.bf16.mxu0 0
        %2273 = vmatpush1.bf16.msra.mxu0 0
        %2274 = vmatprep.subr.bf16.mxu0 0
        %2275 = vmatpush1.bf16.msra.mxu0 0
        %2276 = vmatprep.subr.bf16.mxu0 0
        %2277 = vmatpush1.bf16.msra.mxu0 0
        %2278 = vmatprep.subr.bf16.mxu0 0
        %2279 = vmatpush1.bf16.msra.mxu0 0
        %2280 = vmatprep.subr.bf16.mxu0 0
        %2281 = vmatpush1.bf16.msra.mxu0 0
        %2282 = vmatprep.mubr.bf16.mxu0 0
        %2283 = vmatmul.mubr.bf16.gmra.mrb[0].mxu0 %v726
        %v2284 = vpop.f32.mrb[0].mxu0
        %v2285 = vadd.f32 0.0, %v2284
        %v2286 = vpop.f32.mrb[0].mxu0
        %v2287 = vpop.f32.mrb[0].mxu0
        %v2288 = vadd.f32 0.0, %v2287
        %v2289 = vpop.f32.mrb[0].mxu0
        %2290 = vmatprep.mubr.bf16.mxu0 0
        %2291 = vmatmul.mubr.bf16.gmra.mrb[0].mxu0 %v727
        %v2292 = vpop.f32.mrb[0].mxu0
        %v2293 = vadd.f32 0.0, %v2292
        %v2294 = vpop.f32.mrb[0].mxu0
        %v2295 = vpop.f32.mrb[0].mxu0
        %v2296 = vadd.f32 0.0, %v2295
        %v2297 = vpop.f32.mrb[0].mxu0
        %2298 = vmatprep.mubr.bf16.mxu0 0
        %2299 = vmatmul.mubr.bf16.gmra.mrb[0].mxu0 %v728
        %v2300 = vpop.f32.mrb[0].mxu0
        %v2301 = vadd.f32 0.0, %v2300
        %v2302 = vpop.f32.mrb[0].mxu0
        %v2303 = vpop.f32.mrb[0].mxu0
        %v2304 = vadd.f32 0.0, %v2303
        %v2305 = vpop.f32.mrb[0].mxu0
        %2306 = vmatprep.mubr.bf16.mxu0 0
        %2307 = vmatmul.mubr.bf16.gmra.mrb[0].mxu0 %v729
        %v2308 = vpop.f32.mrb[0].mxu0
        %v2309 = vadd.f32 0.0, %v2308
        %v2310 = vpop.f32.mrb[0].mxu0
        %v2311 = vpop.f32.mrb[0].mxu0
        %v2312 = vadd.f32 0.0, %v2311
        %v2313 = vpop.f32.mrb[0].mxu0
        %2314 = vmatprep.mubr.bf16.mxu0 0
        %2315 = vmatmul.mubr.bf16.gmra.mrb[0].mxu0 %v730
        %v2316 = vpop.f32.mrb[0].mxu0
        %v2317 = vadd.f32 0.0, %v2316
        %v2318 = vpop.f32.mrb[0].mxu0
        %v2319 = vpop.f32.mrb[0].mxu0
        %v2320 = vadd.f32 0.0, %v2319
        %v2321 = vpop.f32.mrb[0].mxu0
        %2322 = vmatprep.mubr.bf16.mxu0 0
        %2323 = vmatmul.mubr.bf16.gmra.mrb[0].mxu0 %v731
        %v2324 = vpop.f32.mrb[0].mxu0
        %v2325 = vadd.f32 0.0, %v2324
        %v2326 = vpop.f32.mrb[0].mxu0
        %v2327 = vpop.f32.mrb[0].mxu0
        %v2328 = vadd.f32 0.0, %v2327
        %v2329 = vpop.f32.mrb[0].mxu0
        %2330 = vmatprep.mubr.bf16.mxu0 0
        %2331 = vmatmul.mubr.bf16.gmra.mrb[0].mxu0 %v732
        %v2332 = vpop.f32.mrb[0].mxu0
        %v2333 = vadd.f32 0.0, %v2332
        %v2334 = vpop.f32.mrb[0].mxu0
        %v2335 = vpop.f32.mrb[0].mxu0
        %v2336 = vadd.f32 0.0, %v2335
        %v2337 = vpop.f32.mrb[0].mxu0
        %2338 = vmatprep.mubr.bf16.mxu0 0
        %2339 = vmatmul.mubr.bf16.gmra.mrb[0].mxu0 %v733
        %v2340 = vpop.f32.mrb[0].mxu0
        %v2341 = vadd.f32 0.0, %v2340
        %v2342 = vpop.f32.mrb[0].mxu0
        %v2343 = vpop.f32.mrb[0].mxu0
        %v2344 = vadd.f32 0.0, %v2343
        %v2345 = vpop.f32.mrb[0].mxu0
        %2346 = vdwg.mxu0
        %v2347 = vadd.f32 %v2169, %v2285
        %v2348 = vadd.f32 %v2170, %v2288
        %v2349 = vadd.f32 %v2171, %v2293
        %v2350 = vadd.f32 %v2172, %v2296
        %v2351 = vadd.f32 %v2173, %v2301
        %v2352 = vadd.f32 %v2174, %v2304
        %v2353 = vadd.f32 %v2175, %v2309
        %v2354 = vadd.f32 %v2176, %v2312
        %v2355 = vadd.f32 %v2177, %v2317
        %v2356 = vadd.f32 %v2178, %v2320
        %v2357 = vadd.f32 %v2179, %v2325
        %v2358 = vadd.f32 %v2180, %v2328
        %v2359 = vadd.f32 %v2181, %v2333
        %v2360 = vadd.f32 %v2182, %v2336
        %v2361 = vadd.f32 %v2183, %v2341
        %v2362 = vadd.f32 %v2184, %v2344
        %v2363 = vld [vmem:[%s2] sm:$0x1]
        %v2365 = vlaneseq
        %v2366 = vshrl.u32 %v2365, 7
        %v2367 = vsub.s32 0, %v2366
        %v2368 = vrot.slane %v2363, %v2367
        %v2370 = vmul.f32 %v2347, %v2368
        %v2371 = vmul.f32 %v2348, %v2368
        %v2372 = vmul.f32 %v2349, %v2368
        %v2373 = vmul.f32 %v2350, %v2368
        %v2374 = vmul.f32 %v2351, %v2368
        %v2375 = vmul.f32 %v2352, %v2368
        %v2376 = vmul.f32 %v2353, %v2368
        %v2377 = vmul.f32 %v2354, %v2368
        %v2378 = vmul.f32 %v2355, %v2368
        %v2379 = vmul.f32 %v2356, %v2368
        %v2380 = vmul.f32 %v2357, %v2368
        %v2381 = vmul.f32 %v2358, %v2368
        %v2382 = vmul.f32 %v2359, %v2368
        %v2383 = vmul.f32 %v2360, %v2368
        %v2384 = vmul.f32 %v2361, %v2368
        %v2385 = vmul.f32 %v2362, %v2368
        %v2386 = vld [vmem:[%s3] sm:$0x1]
        %v2388 = vlaneseq
        %v2389 = vshrl.u32 %v2388, 7
        %v2390 = vsub.s32 0, %v2389
        %v2391 = vrot.slane %v2386, %v2390
        %v2393 = vadd.f32 %v2370, %v2391
        %v2394 = vadd.f32 %v2371, %v2391
        %v2395 = vadd.f32 %v2372, %v2391
        %v2396 = vadd.f32 %v2373, %v2391
        %v2397 = vadd.f32 %v2374, %v2391
        %v2398 = vadd.f32 %v2375, %v2391
        %v2399 = vadd.f32 %v2376, %v2391
        %v2400 = vadd.f32 %v2377, %v2391
        %v2401 = vadd.f32 %v2378, %v2391
        %v2402 = vadd.f32 %v2379, %v2391
        %v2403 = vadd.f32 %v2380, %v2391
        %v2404 = vadd.f32 %v2381, %v2391
        %v2405 = vadd.f32 %v2382, %v2391
        %v2406 = vadd.f32 %v2383, %v2391
        %v2407 = vadd.f32 %v2384, %v2391
        %v2408 = vadd.f32 %v2385, %v2391
        %v2409 = vmax.f32 %v2393, 0.0
        %v2410 = vmax.f32 %v2394, 0.0
        %v2411 = vmax.f32 %v2395, 0.0
        %v2412 = vmax.f32 %v2396, 0.0
        %v2413 = vmax.f32 %v2397, 0.0
        %v2414 = vmax.f32 %v2398, 0.0
        %v2415 = vmax.f32 %v2399, 0.0
        %v2416 = vmax.f32 %v2400, 0.0
        %v2417 = vmax.f32 %v2401, 0.0
        %v2418 = vmax.f32 %v2402, 0.0
        %v2419 = vmax.f32 %v2403, 0.0
        %v2420 = vmax.f32 %v2404, 0.0
        %v2421 = vmax.f32 %v2405, 0.0
        %v2422 = vmax.f32 %v2406, 0.0
        %v2423 = vmax.f32 %v2407, 0.0
        %v2424 = vmax.f32 %v2408, 0.0
        %v2425 = vpack.c.bf16 %v2410, %v2409
        %v2426 = vpack.c.bf16 %v2412, %v2411
        %v2427 = vpack.c.bf16 %v2414, %v2413
        %v2428 = vpack.c.bf16 %v2416, %v2415
        %v2429 = vpack.c.bf16 %v2418, %v2417
        %v2430 = vpack.c.bf16 %v2420, %v2419
        %v2431 = vpack.c.bf16 %v2422, %v2421
        %v2432 = vpack.c.bf16 %v2424, %v2423
        %v2441 = vunpack.c.l.b16 %v2425
        %v2442 = vunpack.c.h.b16 %v2425
        %v2443 = vunpack.c.l.b16 %v2426
        %v2444 = vunpack.c.h.b16 %v2426
        %v2445 = vunpack.c.l.b16 %v2427
        %v2446 = vunpack.c.h.b16 %v2427
        %v2447 = vunpack.c.l.b16 %v2428
        %v2448 = vunpack.c.h.b16 %v2428
        %v2449 = vunpack.c.l.b16 %v2429
        %v2450 = vunpack.c.h.b16 %v2429
        %v2451 = vunpack.c.l.b16 %v2430
        %v2452 = vunpack.c.h.b16 %v2430
        %v2453 = vunpack.c.l.b16 %v2431
        %v2454 = vunpack.c.h.b16 %v2431
        %v2455 = vunpack.c.l.b16 %v2432
        %v2456 = vunpack.c.h.b16 %v2432
        %v2457 = vpack.c.b16 %v2441, %v2441
        %v2458 = vpack.c.b16 %v2442, %v2442
        %v2459 = vpack.c.b16 %v2443, %v2443
        %v2460 = vpack.c.b16 %v2444, %v2444
        %v2461 = vpack.c.b16 %v2445, %v2445
        %v2462 = vpack.c.b16 %v2446, %v2446
        %v2463 = vpack.c.b16 %v2447, %v2447
        %v2464 = vpack.c.b16 %v2448, %v2448
        %v2465 = vpack.c.b16 %v2449, %v2449
        %v2466 = vpack.c.b16 %v2450, %v2450
        %v2467 = vpack.c.b16 %v2451, %v2451
        %v2468 = vpack.c.b16 %v2452, %v2452
        %v2469 = vpack.c.b16 %v2453, %v2453
        %v2470 = vpack.c.b16 %v2454, %v2454
        %v2471 = vpack.c.b16 %v2455, %v2455
        %v2472 = vpack.c.b16 %v2456, %v2456
        %2489 = vst [vmem:[%s248] sm:$0xf] %v2457
        %2490 = vst [vmem:[%s248 + $0x4] sm:$0xf] %v2458
        %2491 = vst [vmem:[%s248 + $0x8] sm:$0xf] %v2459
        %2492 = vst [vmem:[%s248 + $0xc] sm:$0xf] %v2460
        %2493 = vst [vmem:[%s248 + $0x10] sm:$0xf] %v2461
        %2494 = vst [vmem:[%s248 + $0x14] sm:$0xf] %v2462
        %2495 = vst [vmem:[%s248 + $0x18] sm:$0xf] %v2463
        %2496 = vst [vmem:[%s248 + $0x1c] sm:$0xf] %v2464
        %2497 = vst [vmem:[%s248 + $0x20] sm:$0xf] %v2465
        %2498 = vst [vmem:[%s248 + $0x24] sm:$0xf] %v2466
        %2499 = vst [vmem:[%s248 + $0x28] sm:$0xf] %v2467
        %2500 = vst [vmem:[%s248 + $0x2c] sm:$0xf] %v2468
        %2501 = vst [vmem:[%s248 + $0x30] sm:$0xf] %v2469
        %2502 = vst [vmem:[%s248 + $0x34] sm:$0xf] %v2470
        %2503 = vst [vmem:[%s248 + $0x38] sm:$0xf] %v2471
        %2504 = vst [vmem:[%s248 + $0x3c] sm:$0xf] %v2472
        %s2505 = sand.u32 %s135, 1
        %s2506 = scalar_lea.sflag [#allocation4], %s2505
        %s2507 = sand.u32 %s135, 1
        %s2508 = smul.addr %s2507, 64
        %s2509 = scalar_lea.vmem [#allocation7], %s2508
        // Predicated region
        $region45: #{tpu_custom_call.1} parent=35 // pred_check
          %p2510 = pneg %p145
        $region46: #{tpu_custom_call.1} parent=35 // pred_check_branch
          %2512 = sbr.rel (%p2510) target = $region48
        $region47: #{tpu_custom_call.1} parent=35 // pred_region
          %s2513 = smul.u32 8, %s27
          %s2515 = ssub.s32 1024, 1024
          %2516 = vsyncadd %s2506, %s2515
          %s2517 = smul.addr %s2513, 2
          %s2518 = smul.addr %s26, 32
          %s2519 = sadd.s32 %s2517, %s2518
          %s2520 = smul.addr %s2519, 64
          %s2521 = scalar_lea.hbm %s4, %s2520
          %s2522 = sshll.u32 %s2509, 4
          %s2523 = int_to_ptr.vmem [resolvable:$true] %s2522
          %2528 = dma.vmem_to_hbm [thread:$0]  %s2523, 1024, %s2521, %s2506, 64, 64, 4
        $region48: #{tpu_custom_call.1} parent=35 // pred_fallthru
          _
      $region36: #{tpu_custom_call.1} parent=5 // pred_fallthru
        _
      %p2529 = scmp.le.s32.totalorder 2, %s17
      // Predicated region
      $region49: #{tpu_custom_call.1} parent=5 // pred_check
        %p2530 = pneg %p2529
      $region50: #{tpu_custom_call.1} parent=5 // pred_check_branch
        %2532 = sbr.rel (%p2530) target = $region52
      $region51: #{tpu_custom_call.1} parent=5 // pred_region
        %s2533 = ssub.s32 %s17, 2
        // Predicated region
        $region53: #{tpu_custom_call.1} parent=51 // pred_check
          %p2534 = pneg %p151
        $region54: #{tpu_custom_call.1} parent=51 // pred_check_branch
          %2536 = sbr.rel (%p2534) target = $region56
        $region55: #{tpu_custom_call.1} parent=51 // pred_region
          %s2537 = sand.u32 %s136, 1
          %s2538 = scalar_lea.sflag [#allocation4], %s2537
          %s2539 = sand.u32 %s136, 1
          %s2540 = smul.addr %s2539, 64
          %s2541 = scalar_lea.vmem [#allocation7], %s2540
          %2542 = dma.done %s2538, 1024
        $region56: #{tpu_custom_call.1} parent=51 // pred_fallthru
          _
      $region52: #{tpu_custom_call.1} parent=5 // pred_fallthru
        _
    $region6: #{tpu_custom_call.1} parent=1 // loop_footer
      %s21 = sadd.s32 1, %s17
    $region7: #{tpu_custom_call.1} parent=1 // loop_footer_branch
      %16 = sbr.rel target = $region3
    $region8: #{tpu_custom_call.1} parent=1 // loop_exit
      _
    %2543 = vsyncpa [#allocation3], 1
    %s2544 = scalar_lea.sflag [#allocation3], 1
    %2545 = vsyncpa %s2544, 1
    %2546 = vsyncpa [#allocation6], 1
    %2547 = vsyncpa [#allocation4], 1
    %s2548 = scalar_lea.sflag [#allocation4], 1
    %2549 = vsyncpa %s2548, 1

</llo_original>
